<compile_context>
chip_gen: v6e
topology: v6e:2x2x1
jax: 0.10.0
libtpu: 0.0.40
codegen_flags: <defaults>
</compile_context>

<pallas_src>
import functools

import jax
import jax.numpy as jnp
from jax.experimental import pallas as pl
from jax.experimental.pallas import tpu as pltpu

N_BINS = 41  # configs['raw_feature_len'] in the reference repo


def kernal_mus(n_kernels):
    l_mu = [1.0]
    if n_kernels == 1:
        return l_mu
    bin_size = 2.0 / (n_kernels - 1)
    l_mu.append(1.0 - bin_size / 2.0)
    for i in range(1, n_kernels - 1):
        l_mu.append(l_mu[i] - bin_size)
    return l_mu


def kernel_sigmas(n_kernels):
    l_sigma = [0.001]
    if n_kernels == 1:
        return l_sigma
    l_sigma += [0.1] * (n_kernels - 1)
    return l_sigma


def _round_up(x, m):
    return ((x + m - 1) // m) * m


def _matching_kernel(per_ref, paper_ref, mu_ref, ninv_ref, o_ref, acc_ref, *,
                     q_len, p_len):
    qi = pl.program_id(0)
    pj = pl.program_id(1)
    n_pj = pl.num_programs(1)
    tq = per_ref.shape[0]
    tp = paper_ref.shape[0]

    @pl.when(pj == 0)
    def _init():
        acc_ref[...] = jnp.zeros_like(acc_ref)

    # Inputs arrive already L2-normalized (hoisted to the wrapper), so the hot
    # loop is: one MXU matmul + the Gaussian-pooling elementwise chain.
    sim = jax.lax.dot_general(per_ref[...], paper_ref[...],
                              (((1,), (1,)), ((), ())),
                              preferred_element_type=jnp.float32)  # (TQ, TP)

    # Ragged-P handling on the cheap 2-D sim: a sentinel far outside [-1, 1]
    # drives every Gaussian to exactly 0 after the exp. Statically skipped
    # when P divides the tile.
    if p_len % tp != 0:
        col = pj * tp + jax.lax.broadcasted_iota(jnp.int32, (1, tp), 1)
        sim = jnp.where(col < p_len, sim, 1.0e4)

    # Gaussian kernel pooling laid out (TQ, K, TP): P lane-dense, K padded
    # only 41->48 sublanes. mu / -1/(2 sigma^2) are pre-broadcast to (K, TP),
    # so no per-step lane broadcast; no explicit negation either.
    d = sim[:, None, :] - mu_ref[...][None, :, :]          # (TQ, K, TP)
    pv = jnp.exp((d * d) * ninv_ref[...][None, :, :])      # (TQ, K, TP)
    acc_ref[...] += jnp.sum(pv, axis=-1)                   # (TQ, K) lane reduce

    @pl.when(pj == n_pj - 1)
    def _finalize():
        logp = jnp.log(jnp.maximum(acc_ref[...], 1e-10)) * 0.01   # (TQ, K)
        if q_len % tq != 0:
            row = qi * tq + jax.lax.broadcasted_iota(jnp.int32, (tq, 1), 0)
            logp = jnp.where(row < q_len, logp, 0.0)
        o_ref[...] = jnp.sum(logp, axis=0, keepdims=True)[None]   # (1, 1, K)


def matching_model_forward(paper_embedding, per_embedding, *, n_bins=N_BINS,
                           tq_max=128, tp_max=256, min_q_tiles=2):
    """paper_embedding: (P, D) f32, per_embedding: (Q, D) f32 -> (n_bins,) f32."""
    p_len, dim = paper_embedding.shape
    q_len, dim2 = per_embedding.shape
    assert dim == dim2

    # F.normalize(p=2, dim=1) hoisted out of the kernel: one memory-bound XLA
    # pass instead of per_n being redone n_pj times and paper_n n_qi times.
    eps = 1e-12
    paper_n = paper_embedding / jnp.maximum(
        jnp.linalg.norm(paper_embedding, axis=1, keepdims=True), eps)
    per_n = per_embedding / jnp.maximum(
        jnp.linalg.norm(per_embedding, axis=1, keepdims=True), eps)

    # Tile choice: block last dim = full D (legal for any D); tiled row dims
    # are either the full extent or a multiple of 8 (tp also a multiple of 128
    # at scale so the pooling lanes stay dense).
    tq = min(q_len, tq_max)
    tp = min(p_len, tp_max)
    if min_q_tiles > 1 and q_len > 8 and pl.cdiv(q_len, tq) < min_q_tiles:
        # Guarantee >=2 "parallel" Q tiles so v7x's 2 TensorCores both get
        # work. On single-TC chips (v5e/v6e) with very large P prefer
        # min_q_tiles=1 to avoid one extra pass over paper_embedding.
        tq = min(tq, _round_up(pl.cdiv(q_len, min_q_tiles), 8))
    n_qi = pl.cdiv(q_len, tq)
    n_pj = pl.cdiv(p_len, tp)

    mu = jnp.asarray(kernal_mus(n_bins), jnp.float32)
    sigma = jnp.asarray(kernel_sigmas(n_bins), jnp.float32)
    neg_inv2s2 = -1.0 / (2.0 * sigma * sigma)
    # Pre-broadcast to lane width: ~n_bins*tp*4 B extra VMEM each, but removes
    # a per-step (K,1)->(K,TP) lane broadcast from the hot loop.
    mu_b = jnp.broadcast_to(mu[:, None], (n_bins, tp))
    ninv_b = jnp.broadcast_to(neg_inv2s2[:, None], (n_bins, tp))

    # Rough VMEM budget -> explicit limit with headroom under v7x's 64 MiB.
    kpad = _round_up(n_bins, 8)
    vmem_est = (2 * (tq + tp) * dim * 4          # double-buffered per/paper blocks
                + 2 * 2 * n_bins * tp * 4        # mu / neg_inv2s2 blocks
                + tq * kpad * 4                  # accumulator scratch
                + 4 * tq * kpad * tp * 4)        # (TQ,K,TP) elementwise temps
    vmem_limit = int(min(max(int(vmem_est * 1.5), 32 * 1024 * 1024),
                         48 * 1024 * 1024))

    kernel = functools.partial(_matching_kernel, q_len=q_len, p_len=p_len)

    partial_out = pl.pallas_call(
        kernel,
        out_shape=jax.ShapeDtypeStruct((n_qi, 1, n_bins), jnp.float32),
        grid=(n_qi, n_pj),
        in_specs=[
            pl.BlockSpec((tq, dim), lambda qi, pj: (qi, 0)),      # per_n
            pl.BlockSpec((tp, dim), lambda qi, pj: (pj, 0)),      # paper_n
            pl.BlockSpec((n_bins, tp), lambda qi, pj: (0, 0)),    # mu (resident)
            pl.BlockSpec((n_bins, tp), lambda qi, pj: (0, 0)),    # -1/(2 sigma^2)
        ],
        out_specs=pl.BlockSpec((1, 1, n_bins), lambda qi, pj: (qi, 0, 0)),
        scratch_shapes=[pltpu.VMEM((tq, n_bins), jnp.float32)],
        compiler_params=pltpu.CompilerParams(
            dimension_semantics=("parallel", "arbitrary"),
            vmem_limit_bytes=vmem_limit),
    )(per_n, paper_n, mu_b, ninv_b)

    # Tiny final reduction over per-Q-tile partials (keeps the Q axis parallel).
    return jnp.sum(partial_out[:, 0, :], axis=0)


def reference_forward(paper_embedding, per_embedding, n_bins=N_BINS):
    """Plain-JAX reference of the PyTorch forward."""
    mu = jnp.asarray(kernal_mus(n_bins), jnp.float32).reshape(1, 1, n_bins)
    sigma = jnp.asarray(kernel_sigmas(n_bins), jnp.float32).reshape(1, 1, n_bins)
    eps = 1e-12
    pn = paper_embedding / jnp.maximum(
        jnp.linalg.norm(paper_embedding, axis=1, keepdims=True), eps)
    qn = per_embedding / jnp.maximum(
        jnp.linalg.norm(per_embedding, axis=1, keepdims=True), eps)
    sim = (qn @ pn.T)[:, :, None]                                 # (Q, P, 1)
    pv = jnp.exp(-(sim - mu) ** 2 / sigma ** 2 / 2.0)             # (Q, P, K)
    ps = jnp.sum(pv, axis=1)                                      # (Q, K)
    lp = jnp.log(jnp.maximum(ps, 1e-10)) * 0.01
    return jnp.sum(lp, axis=0)                                    # (K,)


if __name__ == "__main__":
    key = jax.random.PRNGKey(0)
    k_paper, k_per = jax.random.split(key)

    # Small but non-trivial: exercises multiple P tiles (ragged last tile),
    # multiple Q tiles (ragged last tile), and the 2-TC-friendly Q split.
    n_paper, n_per, dim = 300, 24, 64
    paper_embedding = jax.random.normal(k_paper, (n_paper, dim), jnp.float32)
    per_embedding = jax.random.normal(k_per, (n_per, dim), jnp.float32)

    out = matching_model_forward(paper_embedding, per_embedding)
    out = jax.block_until_ready(out)

    ref = reference_forward(paper_embedding, per_embedding)
    assert out.shape == (N_BINS,)
    assert jnp.allclose(out, ref, atol=1e-4, rtol=1e-4), float(
        jnp.max(jnp.abs(out - ref)))

    print("KERNEL_OK")
</pallas_src>

<mosaic_0001>
module attributes {stable_mosaic.version = 11 : i64} {
  func.func @_matching_kernel(%arg0: i32, %arg1: i32, %arg2: memref<16x64xf32, #tpu.memory_space<vmem>>, %arg3: memref<256x64xf32, #tpu.memory_space<vmem>>, %arg4: memref<41x256xf32, #tpu.memory_space<vmem>>, %arg5: memref<41x256xf32, #tpu.memory_space<vmem>>, %arg6: memref<1x1x41xf32, #tpu.memory_space<vmem>>, %arg7: memref<16x41xf32, #tpu.memory_space<vmem>>) attributes {dimension_semantics = [#tpu.dimension_semantics<parallel>, #tpu.dimension_semantics<arbitrary>], iteration_bounds = array<i64: 2, 2>, scalar_prefetch = 0 : i64, scratch_operands = 1 : i64, tpu.core_type = #tpu.core_type<tc>, window_params = [{transform_indices = @transform_0, window_bounds = array<i64: 16, 64>}, {transform_indices = @transform_1, window_bounds = array<i64: 256, 64>}, {pipeline_mode = #tpu.pipeline_mode<synchronous>, transform_indices = @transform_2, window_bounds = array<i64: 41, 256>}, {pipeline_mode = #tpu.pipeline_mode<synchronous>, transform_indices = @transform_3, window_bounds = array<i64: 41, 256>}, {transform_indices = @transform_4, window_bounds = array<i64: 1, 1, 41>}]} {
    %c0_i32 = arith.constant 0 : i32
    %0 = arith.cmpi eq, %arg1, %c0_i32 : i32
    %1 = arith.extui %0 : i1 to i32
    %c0_i32_0 = arith.constant 0 : i32
    %2 = arith.cmpi ne, %1, %c0_i32_0 : i32
    scf.if %2 {
      %cst_15 = arith.constant 0.000000e+00 : f32
      %35 = vector.broadcast %cst_15 : f32 to vector<16x41xf32>
      %c0_16 = arith.constant 0 : index
      %c0_17 = arith.constant 0 : index
      %36 = vector.load %arg7[%c0_16, %c0_17] : memref<16x41xf32, #tpu.memory_space<vmem>>, vector<16x41xf32>
      tpu.vector_store %arg7[%c0_16, %c0_17], %35 {strides = array<i32>} : memref<16x41xf32, #tpu.memory_space<vmem>>, vector<16x41xf32>,
    } else {
    }
    %c0 = arith.constant 0 : index
    %c0_1 = arith.constant 0 : index
    %3 = vector.load %arg2[%c0, %c0_1] : memref<16x64xf32, #tpu.memory_space<vmem>>, vector<16x64xf32>
    %c0_2 = arith.constant 0 : index
    %c0_3 = arith.constant 0 : index
    %4 = vector.load %arg3[%c0_2, %c0_3] : memref<256x64xf32, #tpu.memory_space<vmem>>, vector<256x64xf32>
    %cst = arith.constant dense<0.000000e+00> : vector<16x256xf32>
    %5 = tpu.matmul %3, %4, %cst {dimension_numbers = #tpu.dot_dimension_numbers<[1], [1], [0], [0], [0, 0, 1, 0], [], []>} : vector<16x64xf32>, vector<256x64xf32>, vector<16x256xf32> -> vector<16x256xf32>
    %c256_i32 = arith.constant 256 : i32
    %6 = arith.muli %arg1, %c256_i32 : i32
    %7 = tpu.iota {dimensions = array<i32: 1>} : vector<1x256xi32>
    %8 = vector.broadcast %6 : i32 to vector<1x256xi32>
    %9 = arith.addi %8, %7 : vector<1x256xi32>
    %c300_i32 = arith.constant 300 : i32
    %10 = vector.broadcast %c300_i32 : i32 to vector<1x256xi32>
    %11 = arith.cmpi slt, %9, %10 : vector<1x256xi32>
    %cst_4 = arith.constant 1.000000e+04 : f32
    %12 = vector.shape_cast %11 : vector<1x256xi1> to vector<1x256xi1>
    %13 = vector.broadcast %12 : vector<1x256xi1> to vector<16x256xi1>
    %14 = vector.broadcast %cst_4 : f32 to vector<16x256xf32>
    %15 = arith.select %13, %5, %14 : vector<16x256xi1>, vector<16x256xf32>
    %16 = vector.shape_cast %15 : vector<16x256xf32> to vector<16x1x256xf32>
    %c0_5 = arith.constant 0 : index
    %c0_6 = arith.constant 0 : index
    %17 = vector.load %arg4[%c0_5, %c0_6] : memref<41x256xf32, #tpu.memory_space<vmem>>, vector<41x256xf32>
    %18 = vector.shape_cast %17 : vector<41x256xf32> to vector<1x41x256xf32>
    %19 = vector.broadcast %16 : vector<16x1x256xf32> to vector<16x41x256xf32>
    %20 = vector.broadcast %18 : vector<1x41x256xf32> to vector<16x41x256xf32>
    %21 = arith.subf %19, %20 : vector<16x41x256xf32>
    %22 = arith.mulf %21, %21 : vector<16x41x256xf32>
    %c0_7 = arith.constant 0 : index
    %c0_8 = arith.constant 0 : index
    %23 = vector.load %arg5[%c0_7, %c0_8] : memref<41x256xf32, #tpu.memory_space<vmem>>, vector<41x256xf32>
    %24 = vector.shape_cast %23 : vector<41x256xf32> to vector<1x41x256xf32>
    %25 = vector.broadcast %24 : vector<1x41x256xf32> to vector<16x41x256xf32>
    %26 = arith.mulf %22, %25 : vector<16x41x256xf32>
    %27 = math.exp %26 : vector<16x41x256xf32>
    %c0_9 = arith.constant 0 : index
    %c0_10 = arith.constant 0 : index
    %28 = vector.load %arg7[%c0_9, %c0_10] : memref<16x41xf32, #tpu.memory_space<vmem>>, vector<16x41xf32>
    %cst_11 = arith.constant dense<0.000000e+00> : vector<16x41xf32>
    %29 = vector.multi_reduction <add>, %27, %cst_11 [2] : vector<16x41x256xf32> to vector<16x41xf32>
    %30 = arith.addf %28, %29 : vector<16x41xf32>
    %c0_12 = arith.constant 0 : index
    %c0_13 = arith.constant 0 : index
    %31 = vector.load %arg7[%c0_12, %c0_13] : memref<16x41xf32, #tpu.memory_space<vmem>>, vector<16x41xf32>
    tpu.vector_store %arg7[%c0_12, %c0_13], %30 {strides = array<i32>} : memref<16x41xf32, #tpu.memory_space<vmem>>, vector<16x41xf32>,
    %c1_i32 = arith.constant 1 : i32
    %32 = arith.cmpi eq, %arg1, %c1_i32 : i32
    %33 = arith.extui %32 : i1 to i32
    %c0_i32_14 = arith.constant 0 : i32
    %34 = arith.cmpi ne, %33, %c0_i32_14 : i32
    scf.if %34 {
      %c0_15 = arith.constant 0 : index
      %c0_16 = arith.constant 0 : index
      %35 = vector.load %arg7[%c0_15, %c0_16] : memref<16x41xf32, #tpu.memory_space<vmem>>, vector<16x41xf32>
      %cst_17 = arith.constant 1.000000e-10 : f32
      %36 = vector.broadcast %cst_17 : f32 to vector<16x41xf32>
      %37 = arith.maximumf %35, %36 : vector<16x41xf32>
      %38 = math.log %37 : vector<16x41xf32>
      %cst_18 = arith.constant 0.00999999977 : f32
      %39 = vector.broadcast %cst_18 : f32 to vector<16x41xf32>
      %40 = arith.mulf %38, %39 : vector<16x41xf32>
      %c16_i32 = arith.constant 16 : i32
      %41 = arith.muli %arg0, %c16_i32 : i32
      %42 = tpu.iota {dimensions = array<i32: 0>} : vector<16x1xi32>
      %43 = vector.broadcast %41 : i32 to vector<16x1xi32>
      %44 = arith.addi %43, %42 : vector<16x1xi32>
      %c24_i32 = arith.constant 24 : i32
      %45 = vector.broadcast %c24_i32 : i32 to vector<16x1xi32>
      %46 = arith.cmpi slt, %44, %45 : vector<16x1xi32>
      %cst_19 = arith.constant 0.000000e+00 : f32
      %47 = vector.shape_cast %46 : vector<16x1xi1> to vector<16x1xi1>
      %48 = vector.broadcast %47 : vector<16x1xi1> to vector<16x41xi1>
      %49 = vector.broadcast %cst_19 : f32 to vector<16x41xf32>
      %50 = arith.select %48, %40, %49 : vector<16x41xi1>, vector<16x41xf32>
      %cst_20 = arith.constant dense<0.000000e+00> : vector<41xf32>
      %51 = vector.multi_reduction <add>, %50, %cst_20 [0] : vector<16x41xf32> to vector<41xf32>
      %52 = vector.shape_cast %51 : vector<41xf32> to vector<1x41xf32>
      %53 = vector.shape_cast %52 : vector<1x41xf32> to vector<1x1x41xf32>
      %c0_21 = arith.constant 0 : index
      %c0_22 = arith.constant 0 : index
      %c0_23 = arith.constant 0 : index
      %54 = vector.load %arg6[%c0_21, %c0_22, %c0_23] : memref<1x1x41xf32, #tpu.memory_space<vmem>>, vector<1x1x41xf32>
      tpu.vector_store %arg6[%c0_21, %c0_22, %c0_23], %53 {strides = array<i32>} : memref<1x1x41xf32, #tpu.memory_space<vmem>>, vector<1x1x41xf32>,
    } else {
    }
    return
  }
  func.func @transform_0(%arg0: i32, %arg1: i32) -> (i32, i32) {
    %c0_i32 = arith.constant 0 : i32
    %c0_i32_0 = arith.constant 0 : i32
    return %arg0, %c0_i32 : i32, i32
  }
  func.func @transform_1(%arg0: i32, %arg1: i32) -> (i32, i32) {
    %c0_i32 = arith.constant 0 : i32
    %c0_i32_0 = arith.constant 0 : i32
    return %arg1, %c0_i32 : i32, i32
  }
  func.func @transform_2(%arg0: i32, %arg1: i32) -> (i32, i32) {
    %c0_i32 = arith.constant 0 : i32
    %c0_i32_0 = arith.constant 0 : i32
    %c0_i32_1 = arith.constant 0 : i32
    return %c0_i32, %c0_i32_0 : i32, i32
  }
  func.func @transform_3(%arg0: i32, %arg1: i32) -> (i32, i32) {
    %c0_i32 = arith.constant 0 : i32
    %c0_i32_0 = arith.constant 0 : i32
    %c0_i32_1 = arith.constant 0 : i32
    return %c0_i32, %c0_i32_0 : i32, i32
  }
  func.func @transform_4(%arg0: i32, %arg1: i32) -> (i32, i32, i32) {
    %c0_i32 = arith.constant 0 : i32
    %c0_i32_0 = arith.constant 0 : i32
    %c0_i32_1 = arith.constant 0 : i32
    return %arg0, %c0_i32, %c0_i32_0 : i32, i32, i32
  }
}

</mosaic_0001>

<llo_original>
// kernel: tpu_custom_call.1
$region0: #{tpu_custom_call.1}
  #allocation0 [shape = 'u32[]', space=smem, size = 0x4, offset = 0x4, fixed_abs, tag = 'smem constant byte address 0x4 - core index']
  #allocation1 [shape = 'u32[144,128]{1,0:T(1,128)}', space=vmem, size = 0x12000, scoped, tag = 'internal scratch']
  #allocation2 [shape = 'f32[16,41]{1,0:T(8,128)}', space=vmem, size = 0x2000, scoped, tag = 'scratch operand']
  %s0 = inlined_call_operand.vmem [shape: f32[24,64], index: 0, kind: input, shape index: {}]
  %s1 = inlined_call_operand.vmem [shape: f32[300,64], index: 1, kind: input, shape index: {}]
  %s2 = inlined_call_operand.vmem [shape: f32[41,256], index: 2, kind: input, shape index: {}]
  %s3 = inlined_call_operand.vmem [shape: f32[41,256], index: 3, kind: input, shape index: {}]
  %s4 = inlined_call_operand.hbm [shape: f32[2,1,41], index: 4, kind: output, shape index: {}]
  %s5 = sld [smem:[#allocation0]]
  $region57: #{tpu_custom_call.1} parent=0
    _
  %s7 = ssub.s32 1, %s5
  %s8 = scalar_select 0, %s7, %s5
  $region1: #{tpu_custom_call.1} parent=0
    #allocation3 [shape = 'u8[1024]{0}', space=vmem, size = 0x400, scoped, tag = 'output window, operand 0']
    #allocation4 [shape = 's32[2]{0}', space=sflag, size = 0x8, scoped, tag = 'scoped memory for tpu_custom_call.1']
    %9 = vsyncpa [#allocation4], 0
    %s10 = scalar_lea.sflag [#allocation4], 1
    %11 = vsyncpa %s10, 0
    loop: start=0, step=1, limit=6
    $region2: #{tpu_custom_call.1} parent=1 // loop_pre_header
      _
    $region3: #{tpu_custom_call.1} parent=1 // loop_header
      %s13 = sphi 0, %s17
      %p14 = scmp.ge.s32.totalorder %s13, 6
      %s20 = sphi 0, %s32
      %s21 = sphi 0, %s28
      %s22 = sphi 0, %s20
      %s23 = sphi 0, %s21
      %s24 = sphi 0, %s22
      %s25 = sphi 0, %s23
      %s35 = sphi 0, %s37
      %s38 = sphi 0, %s35
      %s39 = sphi 0, %s38
      %s55 = sphi 0, %s39
      %s61 = sphi 0, %s63
      %s64 = sphi 0, %s61
      %s65 = sphi 0, %s64
      %s81 = sphi 0, %s65
      %s85 = sphi 0, %s85
      %s87 = sphi 0, %s85
      %s88 = sphi 0, %s87
      %s102 = sphi 0, %s88
      %s106 = sphi 0, %s106
      %s108 = sphi 0, %s106
      %s109 = sphi 0, %s108
      %s123 = sphi 0, %s109
      %s129 = sphi 0, %s131
      %s132 = sphi 0, %s129
      %s133 = sphi 0, %s132
      %s149 = sphi 0, %s133
    $region4: #{tpu_custom_call.1} parent=1 // loop_header_branch
      %16 = sbr.rel (%p14) target = $region8
    $region5: #{tpu_custom_call.1} parent=1 // loop_body
      %s18 = ssub.s32 %s13, 1
      %s19 = ssub.s32 %s13, 2
      %s26 = sadd.s32 1, %s21
      %p27 = scmp.ge.s32.totalorder %s26, 2
      %s28 = scalar_select %p27, 0, %s26
      %s29 = sadd.s32 1, %s20
      %s30 = scalar_select %p27, %s29, %s20
      %p31 = scmp.ge.s32.totalorder %s30, 2
      %s32 = scalar_select %p31, 0, %s30
      %s33 = ssub.s32 %s20, %s32
      %p34 = scmp.eq.s32.totalorder %s33, 0
      %s36 = sadd.s32 %s35, 1
      %s37 = scalar_select %p34, %s35, %s36
      %p40 = pneg %p34
      %p41 = scmp.eq.s32.totalorder %s13, 3
      %p42 = por %p40, %p41
      %p43 = scmp.ne.s32.totalorder %s35, %s38
      %p44 = scmp.eq.s32.totalorder %s13, 0
      %p45 = por %p43, %p44
      %p46 = scmp.ne.s32.totalorder %s35, %s38
      %p47 = scmp.eq.s32.totalorder %s18, 3
      %p48 = por %p46, %p47
      %p49 = scmp.ne.s32.totalorder %s38, %s39
      %p50 = scmp.eq.s32.totalorder %s18, 0
      %p51 = por %p49, %p50
      %p52 = scmp.ne.s32.totalorder %s38, %s39
      %p53 = scmp.eq.s32.totalorder %s19, 3
      %p54 = por %p52, %p53
      %p56 = scmp.ne.s32.totalorder %s39, %s55
      %p57 = scmp.eq.s32.totalorder %s19, 0
      %p58 = por %p56, %p57
      %s59 = ssub.s32 %s21, %s28
      %p60 = scmp.eq.s32.totalorder %s59, 0
      %s62 = sadd.s32 %s61, 1
      %s63 = scalar_select %p60, %s61, %s62
      %p66 = pneg %p60
      %p67 = scmp.eq.s32.totalorder %s13, 3
      %p68 = por %p66, %p67
      %p69 = scmp.ne.s32.totalorder %s61, %s64
      %p70 = scmp.eq.s32.totalorder %s13, 0
      %p71 = por %p69, %p70
      %p72 = scmp.ne.s32.totalorder %s61, %s64
      %p73 = scmp.eq.s32.totalorder %s18, 3
      %p74 = por %p72, %p73
      %p75 = scmp.ne.s32.totalorder %s64, %s65
      %p76 = scmp.eq.s32.totalorder %s18, 0
      %p77 = por %p75, %p76
      %p78 = scmp.ne.s32.totalorder %s64, %s65
      %p79 = scmp.eq.s32.totalorder %s19, 3
      %p80 = por %p78, %p79
      %p82 = scmp.ne.s32.totalorder %s65, %s81
      %p83 = scmp.eq.s32.totalorder %s19, 0
      %p84 = por %p82, %p83
      %s86 = sadd.s32 %s85, 1
      %p89 = scmp.eq.s32.totalorder %s13, 3
      %p90 = scmp.ne.s32.totalorder %s85, %s87
      %p91 = scmp.eq.s32.totalorder %s13, 0
      %p92 = por %p90, %p91
      %p93 = scmp.ne.s32.totalorder %s85, %s87
      %p94 = scmp.eq.s32.totalorder %s18, 3
      %p95 = por %p93, %p94
      %p96 = scmp.ne.s32.totalorder %s87, %s88
      %p97 = scmp.eq.s32.totalorder %s18, 0
      %p98 = por %p96, %p97
      %p99 = scmp.ne.s32.totalorder %s87, %s88
      %p100 = scmp.eq.s32.totalorder %s19, 3
      %p101 = por %p99, %p100
      %p103 = scmp.ne.s32.totalorder %s88, %s102
      %p104 = scmp.eq.s32.totalorder %s19, 0
      %p105 = por %p103, %p104
      %s107 = sadd.s32 %s106, 1
      %p110 = scmp.eq.s32.totalorder %s13, 3
      %p111 = scmp.ne.s32.totalorder %s106, %s108
      %p112 = scmp.eq.s32.totalorder %s13, 0
      %p113 = por %p111, %p112
      %p114 = scmp.ne.s32.totalorder %s106, %s108
      %p115 = scmp.eq.s32.totalorder %s18, 3
      %p116 = por %p114, %p115
      %p117 = scmp.ne.s32.totalorder %s108, %s109
      %p118 = scmp.eq.s32.totalorder %s18, 0
      %p119 = por %p117, %p118
      %p120 = scmp.ne.s32.totalorder %s108, %s109
      %p121 = scmp.eq.s32.totalorder %s19, 3
      %p122 = por %p120, %p121
      %p124 = scmp.ne.s32.totalorder %s109, %s123
      %p125 = scmp.eq.s32.totalorder %s19, 0
      %p126 = por %p124, %p125
      %s127 = ssub.s32 %s20, %s32
      %p128 = scmp.eq.s32.totalorder %s127, 0
      %s130 = sadd.s32 %s129, 1
      %s131 = scalar_select %p128, %s129, %s130
      %p134 = pneg %p128
      %p135 = scmp.eq.s32.totalorder %s13, 3
      %p136 = por %p134, %p135
      %p137 = scmp.ne.s32.totalorder %s129, %s132
      %p138 = scmp.eq.s32.totalorder %s13, 0
      %p139 = por %p137, %p138
      %p140 = scmp.ne.s32.totalorder %s129, %s132
      %p141 = scmp.eq.s32.totalorder %s18, 3
      %p142 = por %p140, %p141
      %p143 = scmp.ne.s32.totalorder %s132, %s133
      %p144 = scmp.eq.s32.totalorder %s18, 0
      %p145 = por %p143, %p144
      %p146 = scmp.ne.s32.totalorder %s132, %s133
      %p147 = scmp.eq.s32.totalorder %s19, 3
      %p148 = por %p146, %p147
      %p150 = scmp.ne.s32.totalorder %s133, %s149
      %p151 = scmp.eq.s32.totalorder %s19, 0
      %p152 = por %p150, %p151
      %p153 = scmp.le.s32.totalorder 1, %s13
      %p154 = scmp.lt.s32.totalorder %s13, 5
      %p155 = pnand %p153, %p154
      %p156 = pneg %p155
      // Predicated region
      $region9: #{tpu_custom_call.1} parent=5 // pred_check
        _
      $region10: #{tpu_custom_call.1} parent=5 // pred_check_branch
        %158 = sbr.rel (%p155) target = $region12
      $region11: #{tpu_custom_call.1} parent=5 // pred_region
        %s159 = ssub.s32 %s13, 1
        // Predicated region
        $region13: #{tpu_custom_call.1} parent=11 // pred_check
          %p160 = pneg %p98
        $region14: #{tpu_custom_call.1} parent=11 // pred_check_branch
          %162 = sbr.rel (%p160) target = $region16
        $region15: #{tpu_custom_call.1} parent=11 // pred_region
          _
        $region16: #{tpu_custom_call.1} parent=11 // pred_fallthru
          _
        // Predicated region
        $region17: #{tpu_custom_call.1} parent=11 // pred_check
          %p163 = pneg %p119
        $region18: #{tpu_custom_call.1} parent=11 // pred_check_branch
          %165 = sbr.rel (%p163) target = $region20
        $region19: #{tpu_custom_call.1} parent=11 // pred_region
          _
        $region20: #{tpu_custom_call.1} parent=11 // pred_fallthru
          _
      $region12: #{tpu_custom_call.1} parent=5 // pred_fallthru
        _
      %p166 = scmp.lt.s32.totalorder %s13, 4
      // Predicated region
      $region21: #{tpu_custom_call.1} parent=5 // pred_check
        %p167 = pneg %p166
      $region22: #{tpu_custom_call.1} parent=5 // pred_check_branch
        %169 = sbr.rel (%p167) target = $region24
      $region23: #{tpu_custom_call.1} parent=5 // pred_region
        // Predicated region
        $region25: #{tpu_custom_call.1} parent=23 // pred_check
          %p170 = pneg %p45
        $region26: #{tpu_custom_call.1} parent=23 // pred_check_branch
          %172 = sbr.rel (%p170) target = $region28
        $region27: #{tpu_custom_call.1} parent=23 // pred_region
          %s173 = smul.u32 2, %s20
          %s174 = ssub.s32 3, %s173
          %p175 = scmp.lt.s32.totalorder %s174, 2
          %s176 = scalar_select %p175, %s174, 2
          %s177 = smul.u32 128, %s176
          %p178 = scmp.lt.s32.totalorder %s173, 2
          %s179 = scalar_select %p178, %s173, 2
          %s180 = smul.addr %s179, 8
          %s181 = scalar_lea.vmem %s0, %s180
          %s182 = smul.u32 2, %s20
          %s183 = ssub.s32 3, %s182
          %p184 = scmp.lt.s32.totalorder %s183, 2
          %s185 = scalar_select %p184, %s183, 2
          %s186 = smul.u32 128, %s185
        $region28: #{tpu_custom_call.1} parent=23 // pred_fallthru
          _
        // Predicated region
        $region29: #{tpu_custom_call.1} parent=23 // pred_check
          %p187 = pneg %p71
        $region30: #{tpu_custom_call.1} parent=23 // pred_check_branch
          %189 = sbr.rel (%p187) target = $region32
        $region31: #{tpu_custom_call.1} parent=23 // pred_region
          %s190 = smul.u32 32, %s21
          %s191 = ssub.s32 38, %s190
          %p192 = scmp.lt.s32.totalorder %s191, 32
          %s193 = scalar_select %p192, %s191, 32
          %s194 = smul.u32 128, %s193
          %p195 = scmp.lt.s32.totalorder %s190, 37
          %s196 = scalar_select %p195, %s190, 37
          %s197 = smul.addr %s196, 8
          %s198 = scalar_lea.vmem %s1, %s197
          %s199 = smul.u32 32, %s21
          %s200 = ssub.s32 38, %s199
          %p201 = scmp.lt.s32.totalorder %s200, 32
          %s202 = scalar_select %p201, %s200, 32
          %s203 = smul.u32 128, %s202
        $region32: #{tpu_custom_call.1} parent=23 // pred_fallthru
          _
      $region24: #{tpu_custom_call.1} parent=5 // pred_fallthru
        _
      %p204 = scmp.le.s32.totalorder 1, %s13
      %p205 = scmp.lt.s32.totalorder %s13, 5
      %p206 = pnand %p204, %p205
      %p207 = pneg %p206
      // Predicated region
      $region33: #{tpu_custom_call.1} parent=5 // pred_check
        _
      $region34: #{tpu_custom_call.1} parent=5 // pred_check_branch
        %209 = sbr.rel (%p206) target = $region36
      $region35: #{tpu_custom_call.1} parent=5 // pred_region
        %s210 = ssub.s32 %s13, 1
        %s211 = smul.u32 2, %s22
        %s212 = ssub.s32 3, %s211
        %p213 = scmp.lt.s32.totalorder %s212, 2
        %s214 = scalar_select %p213, %s212, 2
        %s215 = smul.u32 128, %s214
        %p216 = scmp.lt.s32.totalorder %s211, 2
        %s217 = scalar_select %p216, %s211, 2
        %s218 = smul.addr %s217, 8
        %s219 = scalar_lea.vmem %s0, %s218
        %p220 = pneg %p51
        %p221 = pneg %p48
        %s222 = smul.u32 32, %s23
        %s223 = ssub.s32 38, %s222
        %p224 = scmp.lt.s32.totalorder %s223, 32
        %s225 = scalar_select %p224, %s223, 32
        %s226 = smul.u32 128, %s225
        %p227 = scmp.lt.s32.totalorder %s222, 37
        %s228 = scalar_select %p227, %s222, 37
        %s229 = smul.addr %s228, 8
        %s230 = scalar_lea.vmem %s1, %s229
        %p231 = pneg %p77
        %p232 = pneg %p74
        %p233 = pneg %p98
        %p234 = pneg %p95
        %p235 = pneg %p119
        %p236 = pneg %p116
        %p237 = pneg %p145
        %p238 = pneg %p142
        %s239 = sand.u32 %s132, 1
        %s240 = scalar_lea.sflag [#allocation4], %s239
        %s241 = sand.u32 %s132, 1
        %s242 = scalar_lea.vmem [#allocation3], %s241
        %s243 = smul.u32 2, %s22
        %s244 = ssub.s32 3, %s243
        %p245 = scmp.lt.s32.totalorder %s244, 2
        %s246 = scalar_select %p245, %s244, 2
        %s247 = smul.u32 128, %s246
        %p248 = scmp.lt.s32.totalorder %s243, 2
        %s249 = scalar_select %p248, %s243, 2
        %s250 = smul.addr %s249, 8
        %s251 = scalar_lea.vmem %s0, %s250
        %s252 = smul.u32 2, %s22
        %s253 = ssub.s32 3, %s252
        %p254 = scmp.lt.s32.totalorder %s253, 2
        %s255 = scalar_select %p254, %s253, 2
        %s256 = smul.u32 128, %s255
        %s257 = smul.u32 32, %s23
        %s258 = ssub.s32 38, %s257
        %p259 = scmp.lt.s32.totalorder %s258, 32
        %s260 = scalar_select %p259, %s258, 32
        %s261 = smul.u32 128, %s260
        %p262 = scmp.lt.s32.totalorder %s257, 37
        %s263 = scalar_select %p262, %s257, 37
        %s264 = smul.addr %s263, 8
        %s265 = scalar_lea.vmem %s1, %s264
        %s266 = smul.u32 32, %s23
        %s267 = ssub.s32 38, %s266
        %p268 = scmp.lt.s32.totalorder %s267, 32
        %s269 = scalar_select %p268, %s267, 32
        %s270 = smul.u32 128, %s269
        %p271 = scmp.eq.s32.totalorder %s23, 0
        // Predicated region
        $region37: #{tpu_custom_call.1} parent=35 // pred_check
          %p272 = pneg %p271
        $region38: #{tpu_custom_call.1} parent=35 // pred_check_branch
          %274 = sbr.rel (%p272) target = $region40
        $region39: #{tpu_custom_call.1} parent=35 // pred_region
          %vm275 = vcmask 334848
          %276 = vst.msk [vmem:[#allocation2] sm:$0xff] %vm275, 0.0
          %277 = vst.msk [vmem:[#allocation2 + $0x8] sm:$0xff] %vm275, 0.0
        $region40: #{tpu_custom_call.1} parent=35 // pred_fallthru
          _
        %v278 = vld [vmem:[%s251] sm:$0xff]
        %v279 = vld [vmem:[%s251 + $0x8] sm:$0xff]
        %v280 = vld [vmem:[%s265] sm:$0xff]
        %v281 = vld [vmem:[%s265 + $0x8] sm:$0xff]
        %v282 = vld [vmem:[%s265 + $0x10] sm:$0xff]
        %v283 = vld [vmem:[%s265 + $0x18] sm:$0xff]
        %v284 = vld [vmem:[%s265 + $0x20] sm:$0xff]
        %v285 = vld [vmem:[%s265 + $0x28] sm:$0xff]
        %v286 = vld [vmem:[%s265 + $0x30] sm:$0xff]
        %v287 = vld [vmem:[%s265 + $0x38] sm:$0xff]
        %v288 = vld [vmem:[%s265 + $0x40] sm:$0xff]
        %v289 = vld [vmem:[%s265 + $0x48] sm:$0xff]
        %v290 = vld [vmem:[%s265 + $0x50] sm:$0xff]
        %v291 = vld [vmem:[%s265 + $0x58] sm:$0xff]
        %v292 = vld [vmem:[%s265 + $0x60] sm:$0xff]
        %v293 = vld [vmem:[%s265 + $0x68] sm:$0xff]
        %v294 = vld [vmem:[%s265 + $0x70] sm:$0xff]
        %v295 = vld [vmem:[%s265 + $0x78] sm:$0xff]
        %v296 = vld [vmem:[%s265 + $0x80] sm:$0xff]
        %v297 = vld [vmem:[%s265 + $0x88] sm:$0xff]
        %v298 = vld [vmem:[%s265 + $0x90] sm:$0xff]
        %v299 = vld [vmem:[%s265 + $0x98] sm:$0xff]
        %v300 = vld [vmem:[%s265 + $0xa0] sm:$0xff]
        %v301 = vld [vmem:[%s265 + $0xa8] sm:$0xff]
        %v302 = vld [vmem:[%s265 + $0xb0] sm:$0xff]
        %v303 = vld [vmem:[%s265 + $0xb8] sm:$0xff]
        %v304 = vld [vmem:[%s265 + $0xc0] sm:$0xff]
        %v305 = vld [vmem:[%s265 + $0xc8] sm:$0xff]
        %v306 = vld [vmem:[%s265 + $0xd0] sm:$0xff]
        %v307 = vld [vmem:[%s265 + $0xd8] sm:$0xff]
        %v308 = vld [vmem:[%s265 + $0xe0] sm:$0xff]
        %v309 = vld [vmem:[%s265 + $0xe8] sm:$0xff]
        %v310 = vld [vmem:[%s265 + $0xf0] sm:$0xff]
        %v311 = vld [vmem:[%s265 + $0xf8] sm:$0xff]
        %vm312 = vcmask 523264
        %v314 = vsel %vm312, %v278, 0
        %v317 = vsel %vm312, %v279, 0
        %v320 = vsel %vm312, %v280, 0
        %v323 = vsel %vm312, %v281, 0
        %v326 = vsel %vm312, %v282, 0
        %v329 = vsel %vm312, %v283, 0
        %v332 = vsel %vm312, %v284, 0
        %v335 = vsel %vm312, %v285, 0
        %v338 = vsel %vm312, %v286, 0
        %v341 = vsel %vm312, %v287, 0
        %v344 = vsel %vm312, %v288, 0
        %v347 = vsel %vm312, %v289, 0
        %v350 = vsel %vm312, %v290, 0
        %v353 = vsel %vm312, %v291, 0
        %v356 = vsel %vm312, %v292, 0
        %v359 = vsel %vm312, %v293, 0
        %v362 = vsel %vm312, %v294, 0
        %v365 = vsel %vm312, %v295, 0
        %v368 = vsel %vm312, %v296, 0
        %v371 = vsel %vm312, %v297, 0
        %v374 = vsel %vm312, %v298, 0
        %v377 = vsel %vm312, %v299, 0
        %v380 = vsel %vm312, %v300, 0
        %v383 = vsel %vm312, %v301, 0
        %v386 = vsel %vm312, %v302, 0
        %v389 = vsel %vm312, %v303, 0
        %v392 = vsel %vm312, %v304, 0
        %v395 = vsel %vm312, %v305, 0
        %v398 = vsel %vm312, %v306, 0
        %v401 = vsel %vm312, %v307, 0
        %v404 = vsel %vm312, %v308, 0
        %v407 = vsel %vm312, %v309, 0
        %v410 = vsel %vm312, %v310, 0
        %v413 = vsel %vm312, %v311, 0
        %415 = vmatprep.subr.mxu0 0.0
        %416 = vmatpush1.xpose.msra.mxu0 %v365
        %417 = vmatprep.subr.mxu0 0.0
        %418 = vmatpush1.xpose.msra.mxu0 %v362
        %419 = vmatprep.subr.mxu0 0.0
        %420 = vmatpush1.xpose.msra.mxu0 %v359
        %421 = vmatprep.subr.mxu0 0.0
        %422 = vmatpush1.xpose.msra.mxu0 %v356
        %423 = vmatprep.subr.mxu0 0.0
        %424 = vmatpush1.xpose.msra.mxu0 %v353
        %425 = vmatprep.subr.mxu0 0.0
        %426 = vmatpush1.xpose.msra.mxu0 %v350
        %427 = vmatprep.subr.mxu0 0.0
        %428 = vmatpush1.xpose.msra.mxu0 %v347
        %429 = vmatprep.subr.mxu0 0.0
        %430 = vmatpush1.xpose.msra.mxu0 %v344
        %431 = vmatprep.subr.mxu0 0.0
        %432 = vmatpush1.xpose.msra.mxu0 %v341
        %433 = vmatprep.subr.mxu0 0.0
        %434 = vmatpush1.xpose.msra.mxu0 %v338
        %435 = vmatprep.subr.mxu0 0.0
        %436 = vmatpush1.xpose.msra.mxu0 %v335
        %437 = vmatprep.subr.mxu0 0.0
        %438 = vmatpush1.xpose.msra.mxu0 %v332
        %439 = vmatprep.subr.mxu0 0.0
        %440 = vmatpush1.xpose.msra.mxu0 %v329
        %441 = vmatprep.subr.mxu0 0.0
        %442 = vmatpush1.xpose.msra.mxu0 %v326
        %443 = vmatprep.subr.mxu0 0.0
        %444 = vmatpush1.xpose.msra.mxu0 %v323
        %445 = vmatprep.subr.mxu0 0.0
        %446 = vmatpush1.xpose.msra.mxu0 %v320
        %447 = vmatprep.subr.mxu0 0.0
        %448 = vmatpush2.xpose.msra.mxu0 %v413
        %449 = vmatprep.subr.mxu0 0.0
        %450 = vmatpush2.xpose.msra.mxu0 %v410
        %451 = vmatprep.subr.mxu0 0.0
        %452 = vmatpush2.xpose.msra.mxu0 %v407
        %453 = vmatprep.subr.mxu0 0.0
        %454 = vmatpush2.xpose.msra.mxu0 %v404
        %455 = vmatprep.subr.mxu0 0.0
        %456 = vmatpush2.xpose.msra.mxu0 %v401
        %457 = vmatprep.subr.mxu0 0.0
        %458 = vmatpush2.xpose.msra.mxu0 %v398
        %459 = vmatprep.subr.mxu0 0.0
        %460 = vmatpush2.xpose.msra.mxu0 %v395
        %461 = vmatprep.subr.mxu0 0.0
        %462 = vmatpush2.xpose.msra.mxu0 %v392
        %463 = vmatprep.subr.mxu0 0.0
        %464 = vmatpush2.xpose.msra.mxu0 %v389
        %465 = vmatprep.subr.mxu0 0.0
        %466 = vmatpush2.xpose.msra.mxu0 %v386
        %467 = vmatprep.subr.mxu0 0.0
        %468 = vmatpush2.xpose.msra.mxu0 %v383
        %469 = vmatprep.subr.mxu0 0.0
        %470 = vmatpush2.xpose.msra.mxu0 %v380
        %471 = vmatprep.subr.mxu0 0.0
        %472 = vmatpush2.xpose.msra.mxu0 %v377
        %473 = vmatprep.subr.mxu0 0.0
        %474 = vmatpush2.xpose.msra.mxu0 %v374
        %475 = vmatprep.subr.mxu0 0.0
        %476 = vmatpush2.xpose.msra.mxu0 %v371
        %477 = vmatprep.subr.mxu0 0.0
        %478 = vmatpush2.xpose.msra.mxu0 %v368
        %479 = vmatprep.mubr.f32.mxu0 0.0
        %480 = vmatmul.mubr.f32.gmra.mxu0 %v314
        %v481 = vpop.f32.mrf.mxu0
        %v482 = vadd.f32 0.0, %v481
        %v483 = vpop.f32.mrf.mxu0
        %v484 = vadd.f32 0.0, %v483
        %485 = vmatprep.mubr.f32.mxu0 0.0
        %486 = vmatmul.mubr.f32.gmra.mxu0 %v317
        %v487 = vpop.f32.mrf.mxu0
        %v488 = vadd.f32 0.0, %v487
        %v489 = vpop.f32.mrf.mxu0
        %v490 = vadd.f32 0.0, %v489
        %491 = vdwg.mxu0
        %s492 = smul.u32 %s23, 256
        %v493 = vlaneseq
        %v494 = vand.u32 %v493, 127
        %v495 = vadd.s32 %v494, 128
        %v496 = vstv %s492
        %v497 = vadd.s32 %v496, %v494
        %v498 = vadd.s32 %v496, %v495
        %vm499 = vcmp.lt.s32.totalorder %v497, 300
        %vm500 = vcmp.lt.s32.totalorder %v498, 300
        %v501 = vsel %vm499, 1, 0
        %v502 = vsel %vm500, 1, 0
        %vm503 = vcmp.eq.s32.totalorder %v501, 1
        %vm504 = vcmp.eq.s32.totalorder %v502, 1
        %v505 = vsel %vm503, %v482, 10000.0
        %v506 = vsel %vm504, %v484, 10000.0
        %v507 = vsel %vm503, %v488, 10000.0
        %v508 = vsel %vm504, %v490, 10000.0
        %v513 = vcombine.low %v505, %v506
        %v514 = vcombine.high %v505, %v506
        %v516 = vunpack.c.l.s4 1966171168
        %v517 = vunpack.c.0.s8 %v516
        %v518 = vlaneseq
        %v519 = vshrl.u32 %v518, 7
        %v520 = vsub.s32 %v517, %v519
        %v521 = vrot.slane %v513, %v520
        %v523 = vunpack.c.l.s4 1966171168
        %v524 = vunpack.c.0.s8 %v523
        %v525 = vlaneseq
        %v526 = vshrl.u32 %v525, 7
        %v527 = vsub.s32 %v524, %v526
        %v528 = vrot.slane %v514, %v527
        %v529 = vcombine.high %v521, %v521
        %v530 = vcombine.high %v528, %v528
        %v532 = vunpack.c.l.s4 1966171168
        %v533 = vunpack.c.0.s8 %v532
        %v534 = vlaneseq
        %v535 = vshrl.u32 %v534, 7
        %v536 = vsub.s32 %v533, %v535
        %v537 = vrot.slane %v521, %v536
        %v539 = vunpack.c.l.s4 1966171168
        %v540 = vunpack.c.0.s8 %v539
        %v541 = vlaneseq
        %v542 = vshrl.u32 %v541, 7
        %v543 = vsub.s32 %v540, %v542
        %v544 = vrot.slane %v528, %v543
        %v546 = vunpack.c.l.s4 1966171168
        %v547 = vunpack.c.0.s8 %v546
        %v548 = vlaneseq
        %v549 = vshrl.u32 %v548, 7
        %v550 = vsub.s32 %v547, %v549
        %v551 = vrot.slane %v529, %v550
        %v553 = vunpack.c.l.s4 1966171168
        %v554 = vunpack.c.0.s8 %v553
        %v555 = vlaneseq
        %v556 = vshrl.u32 %v555, 7
        %v557 = vsub.s32 %v554, %v556
        %v558 = vrot.slane %v530, %v557
        %v559 = vcombine.high %v537, %v537
        %v560 = vcombine.high %v544, %v544
        %v561 = vcombine.high %v551, %v551
        %v562 = vcombine.high %v558, %v558
        %v563 = vcombine.low %v507, %v508
        %v564 = vcombine.high %v507, %v508
        %v566 = vunpack.c.l.s4 1966171168
        %v567 = vunpack.c.0.s8 %v566
        %v568 = vlaneseq
        %v569 = vshrl.u32 %v568, 7
        %v570 = vsub.s32 %v567, %v569
        %v571 = vrot.slane %v563, %v570
        %v573 = vunpack.c.l.s4 1966171168
        %v574 = vunpack.c.0.s8 %v573
        %v575 = vlaneseq
        %v576 = vshrl.u32 %v575, 7
        %v577 = vsub.s32 %v574, %v576
        %v578 = vrot.slane %v564, %v577
        %v579 = vcombine.high %v571, %v571
        %v580 = vcombine.high %v578, %v578
        %v582 = vunpack.c.l.s4 1966171168
        %v583 = vunpack.c.0.s8 %v582
        %v584 = vlaneseq
        %v585 = vshrl.u32 %v584, 7
        %v586 = vsub.s32 %v583, %v585
        %v587 = vrot.slane %v571, %v586
        %v589 = vunpack.c.l.s4 1966171168
        %v590 = vunpack.c.0.s8 %v589
        %v591 = vlaneseq
        %v592 = vshrl.u32 %v591, 7
        %v593 = vsub.s32 %v590, %v592
        %v594 = vrot.slane %v578, %v593
        %v596 = vunpack.c.l.s4 1966171168
        %v597 = vunpack.c.0.s8 %v596
        %v598 = vlaneseq
        %v599 = vshrl.u32 %v598, 7
        %v600 = vsub.s32 %v597, %v599
        %v601 = vrot.slane %v579, %v600
        %v603 = vunpack.c.l.s4 1966171168
        %v604 = vunpack.c.0.s8 %v603
        %v605 = vlaneseq
        %v606 = vshrl.u32 %v605, 7
        %v607 = vsub.s32 %v604, %v606
        %v608 = vrot.slane %v580, %v607
        %v609 = vcombine.high %v587, %v587
        %v610 = vcombine.high %v594, %v594
        %v611 = vcombine.high %v601, %v601
        %v612 = vcombine.high %v608, %v608
        %v613 = vld [vmem:[%s2] sm:$0xff]
        %v614 = vld [vmem:[%s2 + $0x8] sm:$0xff]
        %v615 = vld [vmem:[%s2 + $0x10] sm:$0xff]
        %v616 = vld [vmem:[%s2 + $0x18] sm:$0xff]
        %v617 = vld [vmem:[%s2 + $0x20] sm:$0xff]
        %v618 = vld [vmem:[%s2 + $0x28] sm:$0xff]
        %v619 = vld [vmem:[%s2 + $0x30] sm:$0xff]
        %v620 = vld [vmem:[%s2 + $0x38] sm:$0xff]
        %v621 = vld [vmem:[%s2 + $0x40] sm:$0xff]
        %v622 = vld [vmem:[%s2 + $0x48] sm:$0xff]
        %v623 = vld [vmem:[%s2 + $0x50] sm:$0x1]
        %v624 = vld [vmem:[%s2 + $0x58] sm:$0x1]
        %v625 = vlaneseq
        %v626 = vshrl.u32 %v625, 7
        %v627 = vsub.s32 0, %v626
        %v628 = vrot.slane %v537, %v627
        %v629 = vlaneseq
        %v630 = vshrl.u32 %v629, 7
        %v631 = vsub.s32 1, %v630
        %v632 = vrot.slane %v537, %v631
        %v633 = vlaneseq
        %v634 = vshrl.u32 %v633, 7
        %v635 = vsub.s32 0, %v634
        %v636 = vrot.slane %v551, %v635
        %v637 = vlaneseq
        %v638 = vshrl.u32 %v637, 7
        %v639 = vsub.s32 1, %v638
        %v640 = vrot.slane %v551, %v639
        %v641 = vlaneseq
        %v642 = vshrl.u32 %v641, 7
        %v643 = vsub.s32 0, %v642
        %v644 = vrot.slane %v559, %v643
        %v645 = vlaneseq
        %v646 = vshrl.u32 %v645, 7
        %v647 = vsub.s32 1, %v646
        %v648 = vrot.slane %v559, %v647
        %v649 = vlaneseq
        %v650 = vshrl.u32 %v649, 7
        %v651 = vsub.s32 0, %v650
        %v652 = vrot.slane %v561, %v651
        %v653 = vlaneseq
        %v654 = vshrl.u32 %v653, 7
        %v655 = vsub.s32 1, %v654
        %v656 = vrot.slane %v561, %v655
        %v657 = vlaneseq
        %v658 = vshrl.u32 %v657, 7
        %v659 = vsub.s32 0, %v658
        %v660 = vrot.slane %v544, %v659
        %v661 = vlaneseq
        %v662 = vshrl.u32 %v661, 7
        %v663 = vsub.s32 1, %v662
        %v664 = vrot.slane %v544, %v663
        %v665 = vlaneseq
        %v666 = vshrl.u32 %v665, 7
        %v667 = vsub.s32 0, %v666
        %v668 = vrot.slane %v558, %v667
        %v669 = vlaneseq
        %v670 = vshrl.u32 %v669, 7
        %v671 = vsub.s32 1, %v670
        %v672 = vrot.slane %v558, %v671
        %v673 = vlaneseq
        %v674 = vshrl.u32 %v673, 7
        %v675 = vsub.s32 0, %v674
        %v676 = vrot.slane %v560, %v675
        %v677 = vlaneseq
        %v678 = vshrl.u32 %v677, 7
        %v679 = vsub.s32 1, %v678
        %v680 = vrot.slane %v560, %v679
        %v681 = vlaneseq
        %v682 = vshrl.u32 %v681, 7
        %v683 = vsub.s32 0, %v682
        %v684 = vrot.slane %v562, %v683
        %v685 = vlaneseq
        %v686 = vshrl.u32 %v685, 7
        %v687 = vsub.s32 1, %v686
        %v688 = vrot.slane %v562, %v687
        %v689 = vlaneseq
        %v690 = vshrl.u32 %v689, 7
        %v691 = vsub.s32 0, %v690
        %v692 = vrot.slane %v587, %v691
        %v693 = vlaneseq
        %v694 = vshrl.u32 %v693, 7
        %v695 = vsub.s32 1, %v694
        %v696 = vrot.slane %v587, %v695
        %v697 = vlaneseq
        %v698 = vshrl.u32 %v697, 7
        %v699 = vsub.s32 0, %v698
        %v700 = vrot.slane %v601, %v699
        %v701 = vlaneseq
        %v702 = vshrl.u32 %v701, 7
        %v703 = vsub.s32 1, %v702
        %v704 = vrot.slane %v601, %v703
        %v705 = vlaneseq
        %v706 = vshrl.u32 %v705, 7
        %v707 = vsub.s32 0, %v706
        %v708 = vrot.slane %v609, %v707
        %v709 = vlaneseq
        %v710 = vshrl.u32 %v709, 7
        %v711 = vsub.s32 1, %v710
        %v712 = vrot.slane %v609, %v711
        %v713 = vlaneseq
        %v714 = vshrl.u32 %v713, 7
        %v715 = vsub.s32 0, %v714
        %v716 = vrot.slane %v611, %v715
        %v717 = vlaneseq
        %v718 = vshrl.u32 %v717, 7
        %v719 = vsub.s32 1, %v718
        %v720 = vrot.slane %v611, %v719
        %v721 = vlaneseq
        %v722 = vshrl.u32 %v721, 7
        %v723 = vsub.s32 0, %v722
        %v724 = vrot.slane %v594, %v723
        %v725 = vlaneseq
        %v726 = vshrl.u32 %v725, 7
        %v727 = vsub.s32 1, %v726
        %v728 = vrot.slane %v594, %v727
        %v729 = vlaneseq
        %v730 = vshrl.u32 %v729, 7
        %v731 = vsub.s32 0, %v730
        %v732 = vrot.slane %v608, %v731
        %v733 = vlaneseq
        %v734 = vshrl.u32 %v733, 7
        %v735 = vsub.s32 1, %v734
        %v736 = vrot.slane %v608, %v735
        %v737 = vlaneseq
        %v738 = vshrl.u32 %v737, 7
        %v739 = vsub.s32 0, %v738
        %v740 = vrot.slane %v610, %v739
        %v741 = vlaneseq
        %v742 = vshrl.u32 %v741, 7
        %v743 = vsub.s32 1, %v742
        %v744 = vrot.slane %v610, %v743
        %v745 = vlaneseq
        %v746 = vshrl.u32 %v745, 7
        %v747 = vsub.s32 0, %v746
        %v748 = vrot.slane %v612, %v747
        %v749 = vlaneseq
        %v750 = vshrl.u32 %v749, 7
        %v751 = vsub.s32 1, %v750
        %v752 = vrot.slane %v612, %v751
        %v785 = vsub.f32 %v628, %v613
        %v786 = vsub.f32 %v632, %v614
        %v787 = vsub.f32 %v628, %v615
        %v788 = vsub.f32 %v632, %v616
        %v789 = vsub.f32 %v628, %v617
        %v790 = vsub.f32 %v632, %v618
        %v791 = vsub.f32 %v628, %v619
        %v792 = vsub.f32 %v632, %v620
        %v793 = vsub.f32 %v628, %v621
        %v794 = vsub.f32 %v632, %v622
        %v795 = vsub.f32 %v628, %v623
        %v796 = vsub.f32 %v632, %v624
        %v797 = vsub.f32 %v636, %v613
        %v798 = vsub.f32 %v640, %v614
        %v799 = vsub.f32 %v636, %v615
        %v800 = vsub.f32 %v640, %v616
        %v801 = vsub.f32 %v636, %v617
        %v802 = vsub.f32 %v640, %v618
        %v803 = vsub.f32 %v636, %v619
        %v804 = vsub.f32 %v640, %v620
        %v805 = vsub.f32 %v636, %v621
        %v806 = vsub.f32 %v640, %v622
        %v807 = vsub.f32 %v636, %v623
        %v808 = vsub.f32 %v640, %v624
        %v809 = vsub.f32 %v644, %v613
        %v810 = vsub.f32 %v648, %v614
        %v811 = vsub.f32 %v644, %v615
        %v812 = vsub.f32 %v648, %v616
        %v813 = vsub.f32 %v644, %v617
        %v814 = vsub.f32 %v648, %v618
        %v815 = vsub.f32 %v644, %v619
        %v816 = vsub.f32 %v648, %v620
        %v817 = vsub.f32 %v644, %v621
        %v818 = vsub.f32 %v648, %v622
        %v819 = vsub.f32 %v644, %v623
        %v820 = vsub.f32 %v648, %v624
        %v821 = vsub.f32 %v652, %v613
        %v822 = vsub.f32 %v656, %v614
        %v823 = vsub.f32 %v652, %v615
        %v824 = vsub.f32 %v656, %v616
        %v825 = vsub.f32 %v652, %v617
        %v826 = vsub.f32 %v656, %v618
        %v827 = vsub.f32 %v652, %v619
        %v828 = vsub.f32 %v656, %v620
        %v829 = vsub.f32 %v652, %v621
        %v830 = vsub.f32 %v656, %v622
        %v831 = vsub.f32 %v652, %v623
        %v832 = vsub.f32 %v656, %v624
        %v833 = vsub.f32 %v660, %v613
        %v834 = vsub.f32 %v664, %v614
        %v835 = vsub.f32 %v660, %v615
        %v836 = vsub.f32 %v664, %v616
        %v837 = vsub.f32 %v660, %v617
        %v838 = vsub.f32 %v664, %v618
        %v839 = vsub.f32 %v660, %v619
        %v840 = vsub.f32 %v664, %v620
        %v841 = vsub.f32 %v660, %v621
        %v842 = vsub.f32 %v664, %v622
        %v843 = vsub.f32 %v660, %v623
        %v844 = vsub.f32 %v664, %v624
        %v845 = vsub.f32 %v668, %v613
        %v846 = vsub.f32 %v672, %v614
        %v847 = vsub.f32 %v668, %v615
        %v848 = vsub.f32 %v672, %v616
        %v849 = vsub.f32 %v668, %v617
        %v850 = vsub.f32 %v672, %v618
        %v851 = vsub.f32 %v668, %v619
        %v852 = vsub.f32 %v672, %v620
        %v853 = vsub.f32 %v668, %v621
        %v854 = vsub.f32 %v672, %v622
        %v855 = vsub.f32 %v668, %v623
        %v856 = vsub.f32 %v672, %v624
        %v857 = vsub.f32 %v676, %v613
        %v858 = vsub.f32 %v680, %v614
        %v859 = vsub.f32 %v676, %v615
        %v860 = vsub.f32 %v680, %v616
        %v861 = vsub.f32 %v676, %v617
        %v862 = vsub.f32 %v680, %v618
        %v863 = vsub.f32 %v676, %v619
        %v864 = vsub.f32 %v680, %v620
        %v865 = vsub.f32 %v676, %v621
        %v866 = vsub.f32 %v680, %v622
        %v867 = vsub.f32 %v676, %v623
        %v868 = vsub.f32 %v680, %v624
        %v869 = vsub.f32 %v684, %v613
        %v870 = vsub.f32 %v688, %v614
        %v871 = vsub.f32 %v684, %v615
        %v872 = vsub.f32 %v688, %v616
        %v873 = vsub.f32 %v684, %v617
        %v874 = vsub.f32 %v688, %v618
        %v875 = vsub.f32 %v684, %v619
        %v876 = vsub.f32 %v688, %v620
        %v877 = vsub.f32 %v684, %v621
        %v878 = vsub.f32 %v688, %v622
        %v879 = vsub.f32 %v684, %v623
        %v880 = vsub.f32 %v688, %v624
        %v881 = vsub.f32 %v692, %v613
        %v882 = vsub.f32 %v696, %v614
        %v883 = vsub.f32 %v692, %v615
        %v884 = vsub.f32 %v696, %v616
        %v885 = vsub.f32 %v692, %v617
        %v886 = vsub.f32 %v696, %v618
        %v887 = vsub.f32 %v692, %v619
        %v888 = vsub.f32 %v696, %v620
        %v889 = vsub.f32 %v692, %v621
        %v890 = vsub.f32 %v696, %v622
        %v891 = vsub.f32 %v692, %v623
        %v892 = vsub.f32 %v696, %v624
        %v893 = vsub.f32 %v700, %v613
        %v894 = vsub.f32 %v704, %v614
        %v895 = vsub.f32 %v700, %v615
        %v896 = vsub.f32 %v704, %v616
        %v897 = vsub.f32 %v700, %v617
        %v898 = vsub.f32 %v704, %v618
        %v899 = vsub.f32 %v700, %v619
        %v900 = vsub.f32 %v704, %v620
        %v901 = vsub.f32 %v700, %v621
        %v902 = vsub.f32 %v704, %v622
        %v903 = vsub.f32 %v700, %v623
        %v904 = vsub.f32 %v704, %v624
        %v905 = vsub.f32 %v708, %v613
        %v906 = vsub.f32 %v712, %v614
        %v907 = vsub.f32 %v708, %v615
        %v908 = vsub.f32 %v712, %v616
        %v909 = vsub.f32 %v708, %v617
        %v910 = vsub.f32 %v712, %v618
        %v911 = vsub.f32 %v708, %v619
        %v912 = vsub.f32 %v712, %v620
        %v913 = vsub.f32 %v708, %v621
        %v914 = vsub.f32 %v712, %v622
        %v915 = vsub.f32 %v708, %v623
        %v916 = vsub.f32 %v712, %v624
        %v917 = vsub.f32 %v716, %v613
        %v918 = vsub.f32 %v720, %v614
        %v919 = vsub.f32 %v716, %v615
        %v920 = vsub.f32 %v720, %v616
        %v921 = vsub.f32 %v716, %v617
        %v922 = vsub.f32 %v720, %v618
        %v923 = vsub.f32 %v716, %v619
        %v924 = vsub.f32 %v720, %v620
        %v925 = vsub.f32 %v716, %v621
        %v926 = vsub.f32 %v720, %v622
        %v927 = vsub.f32 %v716, %v623
        %v928 = vsub.f32 %v720, %v624
        %v929 = vsub.f32 %v724, %v613
        %v930 = vsub.f32 %v728, %v614
        %v931 = vsub.f32 %v724, %v615
        %v932 = vsub.f32 %v728, %v616
        %v933 = vsub.f32 %v724, %v617
        %v934 = vsub.f32 %v728, %v618
        %v935 = vsub.f32 %v724, %v619
        %v936 = vsub.f32 %v728, %v620
        %v937 = vsub.f32 %v724, %v621
        %v938 = vsub.f32 %v728, %v622
        %v939 = vsub.f32 %v724, %v623
        %v940 = vsub.f32 %v728, %v624
        %v941 = vsub.f32 %v732, %v613
        %v942 = vsub.f32 %v736, %v614
        %v943 = vsub.f32 %v732, %v615
        %v944 = vsub.f32 %v736, %v616
        %v945 = vsub.f32 %v732, %v617
        %v946 = vsub.f32 %v736, %v618
        %v947 = vsub.f32 %v732, %v619
        %v948 = vsub.f32 %v736, %v620
        %v949 = vsub.f32 %v732, %v621
        %v950 = vsub.f32 %v736, %v622
        %v951 = vsub.f32 %v732, %v623
        %v952 = vsub.f32 %v736, %v624
        %v953 = vsub.f32 %v740, %v613
        %v954 = vsub.f32 %v744, %v614
        %v955 = vsub.f32 %v740, %v615
        %v956 = vsub.f32 %v744, %v616
        %v957 = vsub.f32 %v740, %v617
        %v958 = vsub.f32 %v744, %v618
        %v959 = vsub.f32 %v740, %v619
        %v960 = vsub.f32 %v744, %v620
        %v961 = vsub.f32 %v740, %v621
        %v962 = vsub.f32 %v744, %v622
        %v963 = vsub.f32 %v740, %v623
        %v964 = vsub.f32 %v744, %v624
        %v965 = vsub.f32 %v748, %v613
        %v966 = vsub.f32 %v752, %v614
        %v967 = vsub.f32 %v748, %v615
        %v968 = vsub.f32 %v752, %v616
        %v969 = vsub.f32 %v748, %v617
        %v970 = vsub.f32 %v752, %v618
        %v971 = vsub.f32 %v748, %v619
        %v972 = vsub.f32 %v752, %v620
        %v973 = vsub.f32 %v748, %v621
        %v974 = vsub.f32 %v752, %v622
        %v975 = vsub.f32 %v748, %v623
        %v976 = vsub.f32 %v752, %v624
        %v977 = vmul.f32 %v785, %v785
        %v978 = vmul.f32 %v786, %v786
        %v979 = vmul.f32 %v787, %v787
        %v980 = vmul.f32 %v788, %v788
        %v981 = vmul.f32 %v789, %v789
        %v982 = vmul.f32 %v790, %v790
        %v983 = vmul.f32 %v791, %v791
        %v984 = vmul.f32 %v792, %v792
        %v985 = vmul.f32 %v793, %v793
        %v986 = vmul.f32 %v794, %v794
        %v987 = vmul.f32 %v795, %v795
        %v988 = vmul.f32 %v796, %v796
        %v989 = vmul.f32 %v797, %v797
        %v990 = vmul.f32 %v798, %v798
        %v991 = vmul.f32 %v799, %v799
        %v992 = vmul.f32 %v800, %v800
        %v993 = vmul.f32 %v801, %v801
        %v994 = vmul.f32 %v802, %v802
        %v995 = vmul.f32 %v803, %v803
        %v996 = vmul.f32 %v804, %v804
        %v997 = vmul.f32 %v805, %v805
        %v998 = vmul.f32 %v806, %v806
        %v999 = vmul.f32 %v807, %v807
        %v1000 = vmul.f32 %v808, %v808
        %v1001 = vmul.f32 %v809, %v809
        %v1002 = vmul.f32 %v810, %v810
        %v1003 = vmul.f32 %v811, %v811
        %v1004 = vmul.f32 %v812, %v812
        %v1005 = vmul.f32 %v813, %v813
        %v1006 = vmul.f32 %v814, %v814
        %v1007 = vmul.f32 %v815, %v815
        %v1008 = vmul.f32 %v816, %v816
        %v1009 = vmul.f32 %v817, %v817
        %v1010 = vmul.f32 %v818, %v818
        %v1011 = vmul.f32 %v819, %v819
        %v1012 = vmul.f32 %v820, %v820
        %v1013 = vmul.f32 %v821, %v821
        %v1014 = vmul.f32 %v822, %v822
        %v1015 = vmul.f32 %v823, %v823
        %v1016 = vmul.f32 %v824, %v824
        %v1017 = vmul.f32 %v825, %v825
        %v1018 = vmul.f32 %v826, %v826
        %v1019 = vmul.f32 %v827, %v827
        %v1020 = vmul.f32 %v828, %v828
        %v1021 = vmul.f32 %v829, %v829
        %v1022 = vmul.f32 %v830, %v830
        %v1023 = vmul.f32 %v831, %v831
        %v1024 = vmul.f32 %v832, %v832
        %v1025 = vmul.f32 %v833, %v833
        %v1026 = vmul.f32 %v834, %v834
        %v1027 = vmul.f32 %v835, %v835
        %v1028 = vmul.f32 %v836, %v836
        %v1029 = vmul.f32 %v837, %v837
        %v1030 = vmul.f32 %v838, %v838
        %v1031 = vmul.f32 %v839, %v839
        %v1032 = vmul.f32 %v840, %v840
        %v1033 = vmul.f32 %v841, %v841
        %v1034 = vmul.f32 %v842, %v842
        %v1035 = vmul.f32 %v843, %v843
        %v1036 = vmul.f32 %v844, %v844
        %v1037 = vmul.f32 %v845, %v845
        %v1038 = vmul.f32 %v846, %v846
        %v1039 = vmul.f32 %v847, %v847
        %v1040 = vmul.f32 %v848, %v848
        %v1041 = vmul.f32 %v849, %v849
        %v1042 = vmul.f32 %v850, %v850
        %v1043 = vmul.f32 %v851, %v851
        %v1044 = vmul.f32 %v852, %v852
        %v1045 = vmul.f32 %v853, %v853
        %v1046 = vmul.f32 %v854, %v854
        %v1047 = vmul.f32 %v855, %v855
        %v1048 = vmul.f32 %v856, %v856
        %v1049 = vmul.f32 %v857, %v857
        %v1050 = vmul.f32 %v858, %v858
        %v1051 = vmul.f32 %v859, %v859
        %v1052 = vmul.f32 %v860, %v860
        %v1053 = vmul.f32 %v861, %v861
        %v1054 = vmul.f32 %v862, %v862
        %v1055 = vmul.f32 %v863, %v863
        %v1056 = vmul.f32 %v864, %v864
        %v1057 = vmul.f32 %v865, %v865
        %v1058 = vmul.f32 %v866, %v866
        %v1059 = vmul.f32 %v867, %v867
        %v1060 = vmul.f32 %v868, %v868
        %v1061 = vmul.f32 %v869, %v869
        %v1062 = vmul.f32 %v870, %v870
        %v1063 = vmul.f32 %v871, %v871
        %v1064 = vmul.f32 %v872, %v872
        %v1065 = vmul.f32 %v873, %v873
        %v1066 = vmul.f32 %v874, %v874
        %v1067 = vmul.f32 %v875, %v875
        %v1068 = vmul.f32 %v876, %v876
        %v1069 = vmul.f32 %v877, %v877
        %v1070 = vmul.f32 %v878, %v878
        %v1071 = vmul.f32 %v879, %v879
        %v1072 = vmul.f32 %v880, %v880
        %v1073 = vmul.f32 %v881, %v881
        %v1074 = vmul.f32 %v882, %v882
        %v1075 = vmul.f32 %v883, %v883
        %v1076 = vmul.f32 %v884, %v884
        %v1077 = vmul.f32 %v885, %v885
        %v1078 = vmul.f32 %v886, %v886
        %v1079 = vmul.f32 %v887, %v887
        %v1080 = vmul.f32 %v888, %v888
        %v1081 = vmul.f32 %v889, %v889
        %v1082 = vmul.f32 %v890, %v890
        %v1083 = vmul.f32 %v891, %v891
        %v1084 = vmul.f32 %v892, %v892
        %v1085 = vmul.f32 %v893, %v893
        %v1086 = vmul.f32 %v894, %v894
        %v1087 = vmul.f32 %v895, %v895
        %v1088 = vmul.f32 %v896, %v896
        %v1089 = vmul.f32 %v897, %v897
        %v1090 = vmul.f32 %v898, %v898
        %v1091 = vmul.f32 %v899, %v899
        %v1092 = vmul.f32 %v900, %v900
        %v1093 = vmul.f32 %v901, %v901
        %v1094 = vmul.f32 %v902, %v902
        %v1095 = vmul.f32 %v903, %v903
        %v1096 = vmul.f32 %v904, %v904
        %v1097 = vmul.f32 %v905, %v905
        %v1098 = vmul.f32 %v906, %v906
        %v1099 = vmul.f32 %v907, %v907
        %v1100 = vmul.f32 %v908, %v908
        %v1101 = vmul.f32 %v909, %v909
        %v1102 = vmul.f32 %v910, %v910
        %v1103 = vmul.f32 %v911, %v911
        %v1104 = vmul.f32 %v912, %v912
        %v1105 = vmul.f32 %v913, %v913
        %v1106 = vmul.f32 %v914, %v914
        %v1107 = vmul.f32 %v915, %v915
        %v1108 = vmul.f32 %v916, %v916
        %v1109 = vmul.f32 %v917, %v917
        %v1110 = vmul.f32 %v918, %v918
        %v1111 = vmul.f32 %v919, %v919
        %v1112 = vmul.f32 %v920, %v920
        %v1113 = vmul.f32 %v921, %v921
        %v1114 = vmul.f32 %v922, %v922
        %v1115 = vmul.f32 %v923, %v923
        %v1116 = vmul.f32 %v924, %v924
        %v1117 = vmul.f32 %v925, %v925
        %v1118 = vmul.f32 %v926, %v926
        %v1119 = vmul.f32 %v927, %v927
        %v1120 = vmul.f32 %v928, %v928
        %v1121 = vmul.f32 %v929, %v929
        %v1122 = vmul.f32 %v930, %v930
        %v1123 = vmul.f32 %v931, %v931
        %v1124 = vmul.f32 %v932, %v932
        %v1125 = vmul.f32 %v933, %v933
        %v1126 = vmul.f32 %v934, %v934
        %v1127 = vmul.f32 %v935, %v935
        %v1128 = vmul.f32 %v936, %v936
        %v1129 = vmul.f32 %v937, %v937
        %v1130 = vmul.f32 %v938, %v938
        %v1131 = vmul.f32 %v939, %v939
        %v1132 = vmul.f32 %v940, %v940
        %v1133 = vmul.f32 %v941, %v941
        %v1134 = vmul.f32 %v942, %v942
        %v1135 = vmul.f32 %v943, %v943
        %v1136 = vmul.f32 %v944, %v944
        %v1137 = vmul.f32 %v945, %v945
        %v1138 = vmul.f32 %v946, %v946
        %v1139 = vmul.f32 %v947, %v947
        %v1140 = vmul.f32 %v948, %v948
        %v1141 = vmul.f32 %v949, %v949
        %v1142 = vmul.f32 %v950, %v950
        %v1143 = vmul.f32 %v951, %v951
        %v1144 = vmul.f32 %v952, %v952
        %v1145 = vmul.f32 %v953, %v953
        %v1146 = vmul.f32 %v954, %v954
        %v1147 = vmul.f32 %v955, %v955
        %v1148 = vmul.f32 %v956, %v956
        %v1149 = vmul.f32 %v957, %v957
        %v1150 = vmul.f32 %v958, %v958
        %v1151 = vmul.f32 %v959, %v959
        %v1152 = vmul.f32 %v960, %v960
        %v1153 = vmul.f32 %v961, %v961
        %v1154 = vmul.f32 %v962, %v962
        %v1155 = vmul.f32 %v963, %v963
        %v1156 = vmul.f32 %v964, %v964
        %v1157 = vmul.f32 %v965, %v965
        %v1158 = vmul.f32 %v966, %v966
        %v1159 = vmul.f32 %v967, %v967
        %v1160 = vmul.f32 %v968, %v968
        %v1161 = vmul.f32 %v969, %v969
        %v1162 = vmul.f32 %v970, %v970
        %v1163 = vmul.f32 %v971, %v971
        %v1164 = vmul.f32 %v972, %v972
        %v1165 = vmul.f32 %v973, %v973
        %v1166 = vmul.f32 %v974, %v974
        %v1167 = vmul.f32 %v975, %v975
        %v1168 = vmul.f32 %v976, %v976
        %v1169 = vld [vmem:[%s3] sm:$0xff]
        %v1170 = vld [vmem:[%s3 + $0x8] sm:$0xff]
        %v1171 = vld [vmem:[%s3 + $0x10] sm:$0xff]
        %v1172 = vld [vmem:[%s3 + $0x18] sm:$0xff]
        %v1173 = vld [vmem:[%s3 + $0x20] sm:$0xff]
        %v1174 = vld [vmem:[%s3 + $0x28] sm:$0xff]
        %v1175 = vld [vmem:[%s3 + $0x30] sm:$0xff]
        %v1176 = vld [vmem:[%s3 + $0x38] sm:$0xff]
        %v1177 = vld [vmem:[%s3 + $0x40] sm:$0xff]
        %v1178 = vld [vmem:[%s3 + $0x48] sm:$0xff]
        %v1179 = vld [vmem:[%s3 + $0x50] sm:$0x1]
        %v1180 = vld [vmem:[%s3 + $0x58] sm:$0x1]
        %v1181 = vmul.f32 %v977, %v1169
        %v1182 = vmul.f32 %v978, %v1170
        %v1183 = vmul.f32 %v979, %v1171
        %v1184 = vmul.f32 %v980, %v1172
        %v1185 = vmul.f32 %v981, %v1173
        %v1186 = vmul.f32 %v982, %v1174
        %v1187 = vmul.f32 %v983, %v1175
        %v1188 = vmul.f32 %v984, %v1176
        %v1189 = vmul.f32 %v985, %v1177
        %v1190 = vmul.f32 %v986, %v1178
        %v1191 = vmul.f32 %v987, %v1179
        %v1192 = vmul.f32 %v988, %v1180
        %v1193 = vmul.f32 %v989, %v1169
        %v1194 = vmul.f32 %v990, %v1170
        %v1195 = vmul.f32 %v991, %v1171
        %v1196 = vmul.f32 %v992, %v1172
        %v1197 = vmul.f32 %v993, %v1173
        %v1198 = vmul.f32 %v994, %v1174
        %v1199 = vmul.f32 %v995, %v1175
        %v1200 = vmul.f32 %v996, %v1176
        %v1201 = vmul.f32 %v997, %v1177
        %v1202 = vmul.f32 %v998, %v1178
        %v1203 = vmul.f32 %v999, %v1179
        %v1204 = vmul.f32 %v1000, %v1180
        %v1205 = vmul.f32 %v1001, %v1169
        %v1206 = vmul.f32 %v1002, %v1170
        %v1207 = vmul.f32 %v1003, %v1171
        %v1208 = vmul.f32 %v1004, %v1172
        %v1209 = vmul.f32 %v1005, %v1173
        %v1210 = vmul.f32 %v1006, %v1174
        %v1211 = vmul.f32 %v1007, %v1175
        %v1212 = vmul.f32 %v1008, %v1176
        %v1213 = vmul.f32 %v1009, %v1177
        %v1214 = vmul.f32 %v1010, %v1178
        %v1215 = vmul.f32 %v1011, %v1179
        %v1216 = vmul.f32 %v1012, %v1180
        %v1217 = vmul.f32 %v1013, %v1169
        %v1218 = vmul.f32 %v1014, %v1170
        %v1219 = vmul.f32 %v1015, %v1171
        %v1220 = vmul.f32 %v1016, %v1172
        %v1221 = vmul.f32 %v1017, %v1173
        %v1222 = vmul.f32 %v1018, %v1174
        %v1223 = vmul.f32 %v1019, %v1175
        %v1224 = vmul.f32 %v1020, %v1176
        %v1225 = vmul.f32 %v1021, %v1177
        %v1226 = vmul.f32 %v1022, %v1178
        %v1227 = vmul.f32 %v1023, %v1179
        %v1228 = vmul.f32 %v1024, %v1180
        %v1229 = vmul.f32 %v1025, %v1169
        %v1230 = vmul.f32 %v1026, %v1170
        %v1231 = vmul.f32 %v1027, %v1171
        %v1232 = vmul.f32 %v1028, %v1172
        %v1233 = vmul.f32 %v1029, %v1173
        %v1234 = vmul.f32 %v1030, %v1174
        %v1235 = vmul.f32 %v1031, %v1175
        %v1236 = vmul.f32 %v1032, %v1176
        %v1237 = vmul.f32 %v1033, %v1177
        %v1238 = vmul.f32 %v1034, %v1178
        %v1239 = vmul.f32 %v1035, %v1179
        %v1240 = vmul.f32 %v1036, %v1180
        %v1241 = vmul.f32 %v1037, %v1169
        %v1242 = vmul.f32 %v1038, %v1170
        %v1243 = vmul.f32 %v1039, %v1171
        %v1244 = vmul.f32 %v1040, %v1172
        %v1245 = vmul.f32 %v1041, %v1173
        %v1246 = vmul.f32 %v1042, %v1174
        %v1247 = vmul.f32 %v1043, %v1175
        %v1248 = vmul.f32 %v1044, %v1176
        %v1249 = vmul.f32 %v1045, %v1177
        %v1250 = vmul.f32 %v1046, %v1178
        %v1251 = vmul.f32 %v1047, %v1179
        %v1252 = vmul.f32 %v1048, %v1180
        %v1253 = vmul.f32 %v1049, %v1169
        %v1254 = vmul.f32 %v1050, %v1170
        %v1255 = vmul.f32 %v1051, %v1171
        %v1256 = vmul.f32 %v1052, %v1172
        %v1257 = vmul.f32 %v1053, %v1173
        %v1258 = vmul.f32 %v1054, %v1174
        %v1259 = vmul.f32 %v1055, %v1175
        %v1260 = vmul.f32 %v1056, %v1176
        %v1261 = vmul.f32 %v1057, %v1177
        %v1262 = vmul.f32 %v1058, %v1178
        %v1263 = vmul.f32 %v1059, %v1179
        %v1264 = vmul.f32 %v1060, %v1180
        %v1265 = vmul.f32 %v1061, %v1169
        %v1266 = vmul.f32 %v1062, %v1170
        %v1267 = vmul.f32 %v1063, %v1171
        %v1268 = vmul.f32 %v1064, %v1172
        %v1269 = vmul.f32 %v1065, %v1173
        %v1270 = vmul.f32 %v1066, %v1174
        %v1271 = vmul.f32 %v1067, %v1175
        %v1272 = vmul.f32 %v1068, %v1176
        %v1273 = vmul.f32 %v1069, %v1177
        %v1274 = vmul.f32 %v1070, %v1178
        %v1275 = vmul.f32 %v1071, %v1179
        %v1276 = vmul.f32 %v1072, %v1180
        %v1277 = vmul.f32 %v1073, %v1169
        %v1278 = vmul.f32 %v1074, %v1170
        %v1279 = vmul.f32 %v1075, %v1171
        %v1280 = vmul.f32 %v1076, %v1172
        %v1281 = vmul.f32 %v1077, %v1173
        %v1282 = vmul.f32 %v1078, %v1174
        %v1283 = vmul.f32 %v1079, %v1175
        %v1284 = vmul.f32 %v1080, %v1176
        %v1285 = vmul.f32 %v1081, %v1177
        %v1286 = vmul.f32 %v1082, %v1178
        %v1287 = vmul.f32 %v1083, %v1179
        %v1288 = vmul.f32 %v1084, %v1180
        %v1289 = vmul.f32 %v1085, %v1169
        %v1290 = vmul.f32 %v1086, %v1170
        %v1291 = vmul.f32 %v1087, %v1171
        %v1292 = vmul.f32 %v1088, %v1172
        %v1293 = vmul.f32 %v1089, %v1173
        %v1294 = vmul.f32 %v1090, %v1174
        %v1295 = vmul.f32 %v1091, %v1175
        %v1296 = vmul.f32 %v1092, %v1176
        %v1297 = vmul.f32 %v1093, %v1177
        %v1298 = vmul.f32 %v1094, %v1178
        %v1299 = vmul.f32 %v1095, %v1179
        %v1300 = vmul.f32 %v1096, %v1180
        %v1301 = vmul.f32 %v1097, %v1169
        %v1302 = vmul.f32 %v1098, %v1170
        %v1303 = vmul.f32 %v1099, %v1171
        %v1304 = vmul.f32 %v1100, %v1172
        %v1305 = vmul.f32 %v1101, %v1173
        %v1306 = vmul.f32 %v1102, %v1174
        %v1307 = vmul.f32 %v1103, %v1175
        %v1308 = vmul.f32 %v1104, %v1176
        %v1309 = vmul.f32 %v1105, %v1177
        %v1310 = vmul.f32 %v1106, %v1178
        %v1311 = vmul.f32 %v1107, %v1179
        %v1312 = vmul.f32 %v1108, %v1180
        %v1313 = vmul.f32 %v1109, %v1169
        %v1314 = vmul.f32 %v1110, %v1170
        %v1315 = vmul.f32 %v1111, %v1171
        %v1316 = vmul.f32 %v1112, %v1172
        %v1317 = vmul.f32 %v1113, %v1173
        %v1318 = vmul.f32 %v1114, %v1174
        %v1319 = vmul.f32 %v1115, %v1175
        %v1320 = vmul.f32 %v1116, %v1176
        %v1321 = vmul.f32 %v1117, %v1177
        %v1322 = vmul.f32 %v1118, %v1178
        %v1323 = vmul.f32 %v1119, %v1179
        %v1324 = vmul.f32 %v1120, %v1180
        %v1325 = vmul.f32 %v1121, %v1169
        %v1326 = vmul.f32 %v1122, %v1170
        %v1327 = vmul.f32 %v1123, %v1171
        %v1328 = vmul.f32 %v1124, %v1172
        %v1329 = vmul.f32 %v1125, %v1173
        %v1330 = vmul.f32 %v1126, %v1174
        %v1331 = vmul.f32 %v1127, %v1175
        %v1332 = vmul.f32 %v1128, %v1176
        %v1333 = vmul.f32 %v1129, %v1177
        %v1334 = vmul.f32 %v1130, %v1178
        %v1335 = vmul.f32 %v1131, %v1179
        %v1336 = vmul.f32 %v1132, %v1180
        %v1337 = vmul.f32 %v1133, %v1169
        %v1338 = vmul.f32 %v1134, %v1170
        %v1339 = vmul.f32 %v1135, %v1171
        %v1340 = vmul.f32 %v1136, %v1172
        %v1341 = vmul.f32 %v1137, %v1173
        %v1342 = vmul.f32 %v1138, %v1174
        %v1343 = vmul.f32 %v1139, %v1175
        %v1344 = vmul.f32 %v1140, %v1176
        %v1345 = vmul.f32 %v1141, %v1177
        %v1346 = vmul.f32 %v1142, %v1178
        %v1347 = vmul.f32 %v1143, %v1179
        %v1348 = vmul.f32 %v1144, %v1180
        %v1349 = vmul.f32 %v1145, %v1169
        %v1350 = vmul.f32 %v1146, %v1170
        %v1351 = vmul.f32 %v1147, %v1171
        %v1352 = vmul.f32 %v1148, %v1172
        %v1353 = vmul.f32 %v1149, %v1173
        %v1354 = vmul.f32 %v1150, %v1174
        %v1355 = vmul.f32 %v1151, %v1175
        %v1356 = vmul.f32 %v1152, %v1176
        %v1357 = vmul.f32 %v1153, %v1177
        %v1358 = vmul.f32 %v1154, %v1178
        %v1359 = vmul.f32 %v1155, %v1179
        %v1360 = vmul.f32 %v1156, %v1180
        %v1361 = vmul.f32 %v1157, %v1169
        %v1362 = vmul.f32 %v1158, %v1170
        %v1363 = vmul.f32 %v1159, %v1171
        %v1364 = vmul.f32 %v1160, %v1172
        %v1365 = vmul.f32 %v1161, %v1173
        %v1366 = vmul.f32 %v1162, %v1174
        %v1367 = vmul.f32 %v1163, %v1175
        %v1368 = vmul.f32 %v1164, %v1176
        %v1369 = vmul.f32 %v1165, %v1177
        %v1370 = vmul.f32 %v1166, %v1178
        %v1371 = vmul.f32 %v1167, %v1179
        %v1372 = vmul.f32 %v1168, %v1180
        %v1373 = vmul.f32 %v1181, 1.442695
        %v1374 = vpow.pop %v1373
        %v1375 = vmul.f32 %v1182, 1.442695
        %v1376 = vpow.pop %v1375
        %v1377 = vmul.f32 %v1183, 1.442695
        %v1378 = vpow.pop %v1377
        %v1379 = vmul.f32 %v1184, 1.442695
        %v1380 = vpow.pop %v1379
        %v1381 = vmul.f32 %v1185, 1.442695
        %v1382 = vpow.pop %v1381
        %v1383 = vmul.f32 %v1186, 1.442695
        %v1384 = vpow.pop %v1383
        %v1385 = vmul.f32 %v1187, 1.442695
        %v1386 = vpow.pop %v1385
        %v1387 = vmul.f32 %v1188, 1.442695
        %v1388 = vpow.pop %v1387
        %v1389 = vmul.f32 %v1189, 1.442695
        %v1390 = vpow.pop %v1389
        %v1391 = vmul.f32 %v1190, 1.442695
        %v1392 = vpow.pop %v1391
        %v1393 = vmul.f32 %v1191, 1.442695
        %v1394 = vpow.pop %v1393
        %v1395 = vmul.f32 %v1192, 1.442695
        %v1396 = vpow.pop %v1395
        %v1397 = vmul.f32 %v1193, 1.442695
        %v1398 = vpow.pop %v1397
        %v1399 = vmul.f32 %v1194, 1.442695
        %v1400 = vpow.pop %v1399
        %v1401 = vmul.f32 %v1195, 1.442695
        %v1402 = vpow.pop %v1401
        %v1403 = vmul.f32 %v1196, 1.442695
        %v1404 = vpow.pop %v1403
        %v1405 = vmul.f32 %v1197, 1.442695
        %v1406 = vpow.pop %v1405
        %v1407 = vmul.f32 %v1198, 1.442695
        %v1408 = vpow.pop %v1407
        %v1409 = vmul.f32 %v1199, 1.442695
        %v1410 = vpow.pop %v1409
        %v1411 = vmul.f32 %v1200, 1.442695
        %v1412 = vpow.pop %v1411
        %v1413 = vmul.f32 %v1201, 1.442695
        %v1414 = vpow.pop %v1413
        %v1415 = vmul.f32 %v1202, 1.442695
        %v1416 = vpow.pop %v1415
        %v1417 = vmul.f32 %v1203, 1.442695
        %v1418 = vpow.pop %v1417
        %v1419 = vmul.f32 %v1204, 1.442695
        %v1420 = vpow.pop %v1419
        %v1421 = vmul.f32 %v1205, 1.442695
        %v1422 = vpow.pop %v1421
        %v1423 = vmul.f32 %v1206, 1.442695
        %v1424 = vpow.pop %v1423
        %v1425 = vmul.f32 %v1207, 1.442695
        %v1426 = vpow.pop %v1425
        %v1427 = vmul.f32 %v1208, 1.442695
        %v1428 = vpow.pop %v1427
        %v1429 = vmul.f32 %v1209, 1.442695
        %v1430 = vpow.pop %v1429
        %v1431 = vmul.f32 %v1210, 1.442695
        %v1432 = vpow.pop %v1431
        %v1433 = vmul.f32 %v1211, 1.442695
        %v1434 = vpow.pop %v1433
        %v1435 = vmul.f32 %v1212, 1.442695
        %v1436 = vpow.pop %v1435
        %v1437 = vmul.f32 %v1213, 1.442695
        %v1438 = vpow.pop %v1437
        %v1439 = vmul.f32 %v1214, 1.442695
        %v1440 = vpow.pop %v1439
        %v1441 = vmul.f32 %v1215, 1.442695
        %v1442 = vpow.pop %v1441
        %v1443 = vmul.f32 %v1216, 1.442695
        %v1444 = vpow.pop %v1443
        %v1445 = vmul.f32 %v1217, 1.442695
        %v1446 = vpow.pop %v1445
        %v1447 = vmul.f32 %v1218, 1.442695
        %v1448 = vpow.pop %v1447
        %v1449 = vmul.f32 %v1219, 1.442695
        %v1450 = vpow.pop %v1449
        %v1451 = vmul.f32 %v1220, 1.442695
        %v1452 = vpow.pop %v1451
        %v1453 = vmul.f32 %v1221, 1.442695
        %v1454 = vpow.pop %v1453
        %v1455 = vmul.f32 %v1222, 1.442695
        %v1456 = vpow.pop %v1455
        %v1457 = vmul.f32 %v1223, 1.442695
        %v1458 = vpow.pop %v1457
        %v1459 = vmul.f32 %v1224, 1.442695
        %v1460 = vpow.pop %v1459
        %v1461 = vmul.f32 %v1225, 1.442695
        %v1462 = vpow.pop %v1461
        %v1463 = vmul.f32 %v1226, 1.442695
        %v1464 = vpow.pop %v1463
        %v1465 = vmul.f32 %v1227, 1.442695
        %v1466 = vpow.pop %v1465
        %v1467 = vmul.f32 %v1228, 1.442695
        %v1468 = vpow.pop %v1467
        %v1469 = vmul.f32 %v1229, 1.442695
        %v1470 = vpow.pop %v1469
        %v1471 = vmul.f32 %v1230, 1.442695
        %v1472 = vpow.pop %v1471
        %v1473 = vmul.f32 %v1231, 1.442695
        %v1474 = vpow.pop %v1473
        %v1475 = vmul.f32 %v1232, 1.442695
        %v1476 = vpow.pop %v1475
        %v1477 = vmul.f32 %v1233, 1.442695
        %v1478 = vpow.pop %v1477
        %v1479 = vmul.f32 %v1234, 1.442695
        %v1480 = vpow.pop %v1479
        %v1481 = vmul.f32 %v1235, 1.442695
        %v1482 = vpow.pop %v1481
        %v1483 = vmul.f32 %v1236, 1.442695
        %v1484 = vpow.pop %v1483
        %v1485 = vmul.f32 %v1237, 1.442695
        %v1486 = vpow.pop %v1485
        %v1487 = vmul.f32 %v1238, 1.442695
        %v1488 = vpow.pop %v1487
        %v1489 = vmul.f32 %v1239, 1.442695
        %v1490 = vpow.pop %v1489
        %v1491 = vmul.f32 %v1240, 1.442695
        %v1492 = vpow.pop %v1491
        %v1493 = vmul.f32 %v1241, 1.442695
        %v1494 = vpow.pop %v1493
        %v1495 = vmul.f32 %v1242, 1.442695
        %v1496 = vpow.pop %v1495
        %v1497 = vmul.f32 %v1243, 1.442695
        %v1498 = vpow.pop %v1497
        %v1499 = vmul.f32 %v1244, 1.442695
        %v1500 = vpow.pop %v1499
        %v1501 = vmul.f32 %v1245, 1.442695
        %v1502 = vpow.pop %v1501
        %v1503 = vmul.f32 %v1246, 1.442695
        %v1504 = vpow.pop %v1503
        %v1505 = vmul.f32 %v1247, 1.442695
        %v1506 = vpow.pop %v1505
        %v1507 = vmul.f32 %v1248, 1.442695
        %v1508 = vpow.pop %v1507
        %v1509 = vmul.f32 %v1249, 1.442695
        %v1510 = vpow.pop %v1509
        %v1511 = vmul.f32 %v1250, 1.442695
        %v1512 = vpow.pop %v1511
        %v1513 = vmul.f32 %v1251, 1.442695
        %v1514 = vpow.pop %v1513
        %v1515 = vmul.f32 %v1252, 1.442695
        %v1516 = vpow.pop %v1515
        %v1517 = vmul.f32 %v1253, 1.442695
        %v1518 = vpow.pop %v1517
        %v1519 = vmul.f32 %v1254, 1.442695
        %v1520 = vpow.pop %v1519
        %v1521 = vmul.f32 %v1255, 1.442695
        %v1522 = vpow.pop %v1521
        %v1523 = vmul.f32 %v1256, 1.442695
        %v1524 = vpow.pop %v1523
        %v1525 = vmul.f32 %v1257, 1.442695
        %v1526 = vpow.pop %v1525
        %v1527 = vmul.f32 %v1258, 1.442695
        %v1528 = vpow.pop %v1527
        %v1529 = vmul.f32 %v1259, 1.442695
        %v1530 = vpow.pop %v1529
        %v1531 = vmul.f32 %v1260, 1.442695
        %v1532 = vpow.pop %v1531
        %v1533 = vmul.f32 %v1261, 1.442695
        %v1534 = vpow.pop %v1533
        %v1535 = vmul.f32 %v1262, 1.442695
        %v1536 = vpow.pop %v1535
        %v1537 = vmul.f32 %v1263, 1.442695
        %v1538 = vpow.pop %v1537
        %v1539 = vmul.f32 %v1264, 1.442695
        %v1540 = vpow.pop %v1539
        %v1541 = vmul.f32 %v1265, 1.442695
        %v1542 = vpow.pop %v1541
        %v1543 = vmul.f32 %v1266, 1.442695
        %v1544 = vpow.pop %v1543
        %v1545 = vmul.f32 %v1267, 1.442695
        %v1546 = vpow.pop %v1545
        %v1547 = vmul.f32 %v1268, 1.442695
        %v1548 = vpow.pop %v1547
        %v1549 = vmul.f32 %v1269, 1.442695
        %v1550 = vpow.pop %v1549
        %v1551 = vmul.f32 %v1270, 1.442695
        %v1552 = vpow.pop %v1551
        %v1553 = vmul.f32 %v1271, 1.442695
        %v1554 = vpow.pop %v1553
        %v1555 = vmul.f32 %v1272, 1.442695
        %v1556 = vpow.pop %v1555
        %v1557 = vmul.f32 %v1273, 1.442695
        %v1558 = vpow.pop %v1557
        %v1559 = vmul.f32 %v1274, 1.442695
        %v1560 = vpow.pop %v1559
        %v1561 = vmul.f32 %v1275, 1.442695
        %v1562 = vpow.pop %v1561
        %v1563 = vmul.f32 %v1276, 1.442695
        %v1564 = vpow.pop %v1563
        %v1565 = vmul.f32 %v1277, 1.442695
        %v1566 = vpow.pop %v1565
        %v1567 = vmul.f32 %v1278, 1.442695
        %v1568 = vpow.pop %v1567
        %v1569 = vmul.f32 %v1279, 1.442695
        %v1570 = vpow.pop %v1569
        %v1571 = vmul.f32 %v1280, 1.442695
        %v1572 = vpow.pop %v1571
        %v1573 = vmul.f32 %v1281, 1.442695
        %v1574 = vpow.pop %v1573
        %v1575 = vmul.f32 %v1282, 1.442695
        %v1576 = vpow.pop %v1575
        %v1577 = vmul.f32 %v1283, 1.442695
        %v1578 = vpow.pop %v1577
        %v1579 = vmul.f32 %v1284, 1.442695
        %v1580 = vpow.pop %v1579
        %v1581 = vmul.f32 %v1285, 1.442695
        %v1582 = vpow.pop %v1581
        %v1583 = vmul.f32 %v1286, 1.442695
        %v1584 = vpow.pop %v1583
        %v1585 = vmul.f32 %v1287, 1.442695
        %v1586 = vpow.pop %v1585
        %v1587 = vmul.f32 %v1288, 1.442695
        %v1588 = vpow.pop %v1587
        %v1589 = vmul.f32 %v1289, 1.442695
        %v1590 = vpow.pop %v1589
        %v1591 = vmul.f32 %v1290, 1.442695
        %v1592 = vpow.pop %v1591
        %v1593 = vmul.f32 %v1291, 1.442695
        %v1594 = vpow.pop %v1593
        %v1595 = vmul.f32 %v1292, 1.442695
        %v1596 = vpow.pop %v1595
        %v1597 = vmul.f32 %v1293, 1.442695
        %v1598 = vpow.pop %v1597
        %v1599 = vmul.f32 %v1294, 1.442695
        %v1600 = vpow.pop %v1599
        %v1601 = vmul.f32 %v1295, 1.442695
        %v1602 = vpow.pop %v1601
        %v1603 = vmul.f32 %v1296, 1.442695
        %v1604 = vpow.pop %v1603
        %v1605 = vmul.f32 %v1297, 1.442695
        %v1606 = vpow.pop %v1605
        %v1607 = vmul.f32 %v1298, 1.442695
        %v1608 = vpow.pop %v1607
        %v1609 = vmul.f32 %v1299, 1.442695
        %v1610 = vpow.pop %v1609
        %v1611 = vmul.f32 %v1300, 1.442695
        %v1612 = vpow.pop %v1611
        %v1613 = vmul.f32 %v1301, 1.442695
        %v1614 = vpow.pop %v1613
        %v1615 = vmul.f32 %v1302, 1.442695
        %v1616 = vpow.pop %v1615
        %v1617 = vmul.f32 %v1303, 1.442695
        %v1618 = vpow.pop %v1617
        %v1619 = vmul.f32 %v1304, 1.442695
        %v1620 = vpow.pop %v1619
        %v1621 = vmul.f32 %v1305, 1.442695
        %v1622 = vpow.pop %v1621
        %v1623 = vmul.f32 %v1306, 1.442695
        %v1624 = vpow.pop %v1623
        %v1625 = vmul.f32 %v1307, 1.442695
        %v1626 = vpow.pop %v1625
        %v1627 = vmul.f32 %v1308, 1.442695
        %v1628 = vpow.pop %v1627
        %v1629 = vmul.f32 %v1309, 1.442695
        %v1630 = vpow.pop %v1629
        %v1631 = vmul.f32 %v1310, 1.442695
        %v1632 = vpow.pop %v1631
        %v1633 = vmul.f32 %v1311, 1.442695
        %v1634 = vpow.pop %v1633
        %v1635 = vmul.f32 %v1312, 1.442695
        %v1636 = vpow.pop %v1635
        %v1637 = vmul.f32 %v1313, 1.442695
        %v1638 = vpow.pop %v1637
        %v1639 = vmul.f32 %v1314, 1.442695
        %v1640 = vpow.pop %v1639
        %v1641 = vmul.f32 %v1315, 1.442695
        %v1642 = vpow.pop %v1641
        %v1643 = vmul.f32 %v1316, 1.442695
        %v1644 = vpow.pop %v1643
        %v1645 = vmul.f32 %v1317, 1.442695
        %v1646 = vpow.pop %v1645
        %v1647 = vmul.f32 %v1318, 1.442695
        %v1648 = vpow.pop %v1647
        %v1649 = vmul.f32 %v1319, 1.442695
        %v1650 = vpow.pop %v1649
        %v1651 = vmul.f32 %v1320, 1.442695
        %v1652 = vpow.pop %v1651
        %v1653 = vmul.f32 %v1321, 1.442695
        %v1654 = vpow.pop %v1653
        %v1655 = vmul.f32 %v1322, 1.442695
        %v1656 = vpow.pop %v1655
        %v1657 = vmul.f32 %v1323, 1.442695
        %v1658 = vpow.pop %v1657
        %v1659 = vmul.f32 %v1324, 1.442695
        %v1660 = vpow.pop %v1659
        %v1661 = vmul.f32 %v1325, 1.442695
        %v1662 = vpow.pop %v1661
        %v1663 = vmul.f32 %v1326, 1.442695
        %v1664 = vpow.pop %v1663
        %v1665 = vmul.f32 %v1327, 1.442695
        %v1666 = vpow.pop %v1665
        %v1667 = vmul.f32 %v1328, 1.442695
        %v1668 = vpow.pop %v1667
        %v1669 = vmul.f32 %v1329, 1.442695
        %v1670 = vpow.pop %v1669
        %v1671 = vmul.f32 %v1330, 1.442695
        %v1672 = vpow.pop %v1671
        %v1673 = vmul.f32 %v1331, 1.442695
        %v1674 = vpow.pop %v1673
        %v1675 = vmul.f32 %v1332, 1.442695
        %v1676 = vpow.pop %v1675
        %v1677 = vmul.f32 %v1333, 1.442695
        %v1678 = vpow.pop %v1677
        %v1679 = vmul.f32 %v1334, 1.442695
        %v1680 = vpow.pop %v1679
        %v1681 = vmul.f32 %v1335, 1.442695
        %v1682 = vpow.pop %v1681
        %v1683 = vmul.f32 %v1336, 1.442695
        %v1684 = vpow.pop %v1683
        %v1685 = vmul.f32 %v1337, 1.442695
        %v1686 = vpow.pop %v1685
        %v1687 = vmul.f32 %v1338, 1.442695
        %v1688 = vpow.pop %v1687
        %v1689 = vmul.f32 %v1339, 1.442695
        %v1690 = vpow.pop %v1689
        %v1691 = vmul.f32 %v1340, 1.442695
        %v1692 = vpow.pop %v1691
        %v1693 = vmul.f32 %v1341, 1.442695
        %v1694 = vpow.pop %v1693
        %v1695 = vmul.f32 %v1342, 1.442695
        %v1696 = vpow.pop %v1695
        %v1697 = vmul.f32 %v1343, 1.442695
        %v1698 = vpow.pop %v1697
        %v1699 = vmul.f32 %v1344, 1.442695
        %v1700 = vpow.pop %v1699
        %v1701 = vmul.f32 %v1345, 1.442695
        %v1702 = vpow.pop %v1701
        %v1703 = vmul.f32 %v1346, 1.442695
        %v1704 = vpow.pop %v1703
        %v1705 = vmul.f32 %v1347, 1.442695
        %v1706 = vpow.pop %v1705
        %v1707 = vmul.f32 %v1348, 1.442695
        %v1708 = vpow.pop %v1707
        %v1709 = vmul.f32 %v1349, 1.442695
        %v1710 = vpow.pop %v1709
        %v1711 = vmul.f32 %v1350, 1.442695
        %v1712 = vpow.pop %v1711
        %v1713 = vmul.f32 %v1351, 1.442695
        %v1714 = vpow.pop %v1713
        %v1715 = vmul.f32 %v1352, 1.442695
        %v1716 = vpow.pop %v1715
        %v1717 = vmul.f32 %v1353, 1.442695
        %v1718 = vpow.pop %v1717
        %v1719 = vmul.f32 %v1354, 1.442695
        %v1720 = vpow.pop %v1719
        %v1721 = vmul.f32 %v1355, 1.442695
        %v1722 = vpow.pop %v1721
        %v1723 = vmul.f32 %v1356, 1.442695
        %v1724 = vpow.pop %v1723
        %v1725 = vmul.f32 %v1357, 1.442695
        %v1726 = vpow.pop %v1725
        %v1727 = vmul.f32 %v1358, 1.442695
        %v1728 = vpow.pop %v1727
        %v1729 = vmul.f32 %v1359, 1.442695
        %v1730 = vpow.pop %v1729
        %v1731 = vmul.f32 %v1360, 1.442695
        %v1732 = vpow.pop %v1731
        %v1733 = vmul.f32 %v1361, 1.442695
        %v1734 = vpow.pop %v1733
        %v1735 = vmul.f32 %v1362, 1.442695
        %v1736 = vpow.pop %v1735
        %v1737 = vmul.f32 %v1363, 1.442695
        %v1738 = vpow.pop %v1737
        %v1739 = vmul.f32 %v1364, 1.442695
        %v1740 = vpow.pop %v1739
        %v1741 = vmul.f32 %v1365, 1.442695
        %v1742 = vpow.pop %v1741
        %v1743 = vmul.f32 %v1366, 1.442695
        %v1744 = vpow.pop %v1743
        %v1745 = vmul.f32 %v1367, 1.442695
        %v1746 = vpow.pop %v1745
        %v1747 = vmul.f32 %v1368, 1.442695
        %v1748 = vpow.pop %v1747
        %v1749 = vmul.f32 %v1369, 1.442695
        %v1750 = vpow.pop %v1749
        %v1751 = vmul.f32 %v1370, 1.442695
        %v1752 = vpow.pop %v1751
        %v1753 = vmul.f32 %v1371, 1.442695
        %v1754 = vpow.pop %v1753
        %v1755 = vmul.f32 %v1372, 1.442695
        %v1756 = vpow.pop %v1755
        %v1757 = vld [vmem:[#allocation2] sm:$0xff]
        %v1758 = vld [vmem:[#allocation2 + $0x8] sm:$0xff]
        %v1759 = vadd.f32 %v1374, %v1376
        %1760 = vadd.xlane.f32.xlu0 %v1759
        %v1761 = vpop.xlane.xlu0 %1760
        %v1762 = vadd.f32 %v1378, %v1380
        %1763 = vadd.xlane.f32.xlu0 %v1762
        %v1764 = vpop.xlane.xlu0 %1763
        %v1765 = vadd.f32 %v1382, %v1384
        %1766 = vadd.xlane.f32.xlu0 %v1765
        %v1767 = vpop.xlane.xlu0 %1766
        %v1768 = vadd.f32 %v1386, %v1388
        %1769 = vadd.xlane.f32.xlu0 %v1768
        %v1770 = vpop.xlane.xlu0 %1769
        %v1771 = vadd.f32 %v1390, %v1392
        %1772 = vadd.xlane.f32.xlu0 %v1771
        %v1773 = vpop.xlane.xlu0 %1772
        %vm1774 = vcmask 1040384
        %v1775 = vsel %vm1774, %v1394, 0.0
        %v1776 = vsel %vm1774, %v1396, 0.0
        %v1777 = vadd.f32 %v1775, %v1776
        %1778 = vadd.xlane.f32.xlu0 %v1777
        %v1779 = vpop.xlane.xlu0 %1778
        %v1780 = vadd.f32 %v1398, %v1400
        %1781 = vadd.xlane.f32.xlu0 %v1780
        %v1782 = vpop.xlane.xlu0 %1781
        %v1783 = vadd.f32 %v1402, %v1404
        %1784 = vadd.xlane.f32.xlu0 %v1783
        %v1785 = vpop.xlane.xlu0 %1784
        %v1786 = vadd.f32 %v1406, %v1408
        %1787 = vadd.xlane.f32.xlu0 %v1786
        %v1788 = vpop.xlane.xlu0 %1787
        %v1789 = vadd.f32 %v1410, %v1412
        %1790 = vadd.xlane.f32.xlu0 %v1789
        %v1791 = vpop.xlane.xlu0 %1790
        %v1792 = vadd.f32 %v1414, %v1416
        %1793 = vadd.xlane.f32.xlu0 %v1792
        %v1794 = vpop.xlane.xlu0 %1793
        %v1795 = vsel %vm1774, %v1418, 0.0
        %v1796 = vsel %vm1774, %v1420, 0.0
        %v1797 = vadd.f32 %v1795, %v1796
        %1798 = vadd.xlane.f32.xlu0 %v1797
        %v1799 = vpop.xlane.xlu0 %1798
        %v1800 = vadd.f32 %v1422, %v1424
        %1801 = vadd.xlane.f32.xlu0 %v1800
        %v1802 = vpop.xlane.xlu0 %1801
        %v1803 = vadd.f32 %v1426, %v1428
        %1804 = vadd.xlane.f32.xlu0 %v1803
        %v1805 = vpop.xlane.xlu0 %1804
        %v1806 = vadd.f32 %v1430, %v1432
        %1807 = vadd.xlane.f32.xlu0 %v1806
        %v1808 = vpop.xlane.xlu0 %1807
        %v1809 = vadd.f32 %v1434, %v1436
        %1810 = vadd.xlane.f32.xlu0 %v1809
        %v1811 = vpop.xlane.xlu0 %1810
        %v1812 = vadd.f32 %v1438, %v1440
        %1813 = vadd.xlane.f32.xlu0 %v1812
        %v1814 = vpop.xlane.xlu0 %1813
        %v1815 = vsel %vm1774, %v1442, 0.0
        %v1816 = vsel %vm1774, %v1444, 0.0
        %v1817 = vadd.f32 %v1815, %v1816
        %1818 = vadd.xlane.f32.xlu0 %v1817
        %v1819 = vpop.xlane.xlu0 %1818
        %v1820 = vadd.f32 %v1446, %v1448
        %1821 = vadd.xlane.f32.xlu0 %v1820
        %v1822 = vpop.xlane.xlu0 %1821
        %v1823 = vadd.f32 %v1450, %v1452
        %1824 = vadd.xlane.f32.xlu0 %v1823
        %v1825 = vpop.xlane.xlu0 %1824
        %v1826 = vadd.f32 %v1454, %v1456
        %1827 = vadd.xlane.f32.xlu0 %v1826
        %v1828 = vpop.xlane.xlu0 %1827
        %v1829 = vadd.f32 %v1458, %v1460
        %1830 = vadd.xlane.f32.xlu0 %v1829
        %v1831 = vpop.xlane.xlu0 %1830
        %v1832 = vadd.f32 %v1462, %v1464
        %1833 = vadd.xlane.f32.xlu0 %v1832
        %v1834 = vpop.xlane.xlu0 %1833
        %v1835 = vsel %vm1774, %v1466, 0.0
        %v1836 = vsel %vm1774, %v1468, 0.0
        %v1837 = vadd.f32 %v1835, %v1836
        %1838 = vadd.xlane.f32.xlu0 %v1837
        %v1839 = vpop.xlane.xlu0 %1838
        %v1840 = vadd.f32 %v1470, %v1472
        %1841 = vadd.xlane.f32.xlu0 %v1840
        %v1842 = vpop.xlane.xlu0 %1841
        %v1843 = vadd.f32 %v1474, %v1476
        %1844 = vadd.xlane.f32.xlu0 %v1843
        %v1845 = vpop.xlane.xlu0 %1844
        %v1846 = vadd.f32 %v1478, %v1480
        %1847 = vadd.xlane.f32.xlu0 %v1846
        %v1848 = vpop.xlane.xlu0 %1847
        %v1849 = vadd.f32 %v1482, %v1484
        %1850 = vadd.xlane.f32.xlu0 %v1849
        %v1851 = vpop.xlane.xlu0 %1850
        %v1852 = vadd.f32 %v1486, %v1488
        %1853 = vadd.xlane.f32.xlu0 %v1852
        %v1854 = vpop.xlane.xlu0 %1853
        %v1855 = vsel %vm1774, %v1490, 0.0
        %v1856 = vsel %vm1774, %v1492, 0.0
        %v1857 = vadd.f32 %v1855, %v1856
        %1858 = vadd.xlane.f32.xlu0 %v1857
        %v1859 = vpop.xlane.xlu0 %1858
        %v1860 = vadd.f32 %v1494, %v1496
        %1861 = vadd.xlane.f32.xlu0 %v1860
        %v1862 = vpop.xlane.xlu0 %1861
        %v1863 = vadd.f32 %v1498, %v1500
        %1864 = vadd.xlane.f32.xlu0 %v1863
        %v1865 = vpop.xlane.xlu0 %1864
        %v1866 = vadd.f32 %v1502, %v1504
        %1867 = vadd.xlane.f32.xlu0 %v1866
        %v1868 = vpop.xlane.xlu0 %1867
        %v1869 = vadd.f32 %v1506, %v1508
        %1870 = vadd.xlane.f32.xlu0 %v1869
        %v1871 = vpop.xlane.xlu0 %1870
        %v1872 = vadd.f32 %v1510, %v1512
        %1873 = vadd.xlane.f32.xlu0 %v1872
        %v1874 = vpop.xlane.xlu0 %1873
        %v1875 = vsel %vm1774, %v1514, 0.0
        %v1876 = vsel %vm1774, %v1516, 0.0
        %v1877 = vadd.f32 %v1875, %v1876
        %1878 = vadd.xlane.f32.xlu0 %v1877
        %v1879 = vpop.xlane.xlu0 %1878
        %v1880 = vadd.f32 %v1518, %v1520
        %1881 = vadd.xlane.f32.xlu0 %v1880
        %v1882 = vpop.xlane.xlu0 %1881
        %v1883 = vadd.f32 %v1522, %v1524
        %1884 = vadd.xlane.f32.xlu0 %v1883
        %v1885 = vpop.xlane.xlu0 %1884
        %v1886 = vadd.f32 %v1526, %v1528
        %1887 = vadd.xlane.f32.xlu0 %v1886
        %v1888 = vpop.xlane.xlu0 %1887
        %v1889 = vadd.f32 %v1530, %v1532
        %1890 = vadd.xlane.f32.xlu0 %v1889
        %v1891 = vpop.xlane.xlu0 %1890
        %v1892 = vadd.f32 %v1534, %v1536
        %1893 = vadd.xlane.f32.xlu0 %v1892
        %v1894 = vpop.xlane.xlu0 %1893
        %v1895 = vsel %vm1774, %v1538, 0.0
        %v1896 = vsel %vm1774, %v1540, 0.0
        %v1897 = vadd.f32 %v1895, %v1896
        %1898 = vadd.xlane.f32.xlu0 %v1897
        %v1899 = vpop.xlane.xlu0 %1898
        %v1900 = vadd.f32 %v1542, %v1544
        %1901 = vadd.xlane.f32.xlu0 %v1900
        %v1902 = vpop.xlane.xlu0 %1901
        %v1903 = vadd.f32 %v1546, %v1548
        %1904 = vadd.xlane.f32.xlu0 %v1903
        %v1905 = vpop.xlane.xlu0 %1904
        %v1906 = vadd.f32 %v1550, %v1552
        %1907 = vadd.xlane.f32.xlu0 %v1906
        %v1908 = vpop.xlane.xlu0 %1907
        %v1909 = vadd.f32 %v1554, %v1556
        %1910 = vadd.xlane.f32.xlu0 %v1909
        %v1911 = vpop.xlane.xlu0 %1910
        %v1912 = vadd.f32 %v1558, %v1560
        %1913 = vadd.xlane.f32.xlu0 %v1912
        %v1914 = vpop.xlane.xlu0 %1913
        %v1915 = vsel %vm1774, %v1562, 0.0
        %v1916 = vsel %vm1774, %v1564, 0.0
        %v1917 = vadd.f32 %v1915, %v1916
        %1918 = vadd.xlane.f32.xlu0 %v1917
        %v1919 = vpop.xlane.xlu0 %1918
        %v1920 = vadd.f32 %v1566, %v1568
        %1921 = vadd.xlane.f32.xlu0 %v1920
        %v1922 = vpop.xlane.xlu0 %1921
        %v1923 = vadd.f32 %v1570, %v1572
        %1924 = vadd.xlane.f32.xlu0 %v1923
        %v1925 = vpop.xlane.xlu0 %1924
        %v1926 = vadd.f32 %v1574, %v1576
        %1927 = vadd.xlane.f32.xlu0 %v1926
        %v1928 = vpop.xlane.xlu0 %1927
        %v1929 = vadd.f32 %v1578, %v1580
        %1930 = vadd.xlane.f32.xlu0 %v1929
        %v1931 = vpop.xlane.xlu0 %1930
        %v1932 = vadd.f32 %v1582, %v1584
        %1933 = vadd.xlane.f32.xlu0 %v1932
        %v1934 = vpop.xlane.xlu0 %1933
        %v1935 = vsel %vm1774, %v1586, 0.0
        %v1936 = vsel %vm1774, %v1588, 0.0
        %v1937 = vadd.f32 %v1935, %v1936
        %1938 = vadd.xlane.f32.xlu0 %v1937
        %v1939 = vpop.xlane.xlu0 %1938
        %v1940 = vadd.f32 %v1590, %v1592
        %1941 = vadd.xlane.f32.xlu0 %v1940
        %v1942 = vpop.xlane.xlu0 %1941
        %v1943 = vadd.f32 %v1594, %v1596
        %1944 = vadd.xlane.f32.xlu0 %v1943
        %v1945 = vpop.xlane.xlu0 %1944
        %v1946 = vadd.f32 %v1598, %v1600
        %1947 = vadd.xlane.f32.xlu0 %v1946
        %v1948 = vpop.xlane.xlu0 %1947
        %v1949 = vadd.f32 %v1602, %v1604
        %1950 = vadd.xlane.f32.xlu0 %v1949
        %v1951 = vpop.xlane.xlu0 %1950
        %v1952 = vadd.f32 %v1606, %v1608
        %1953 = vadd.xlane.f32.xlu0 %v1952
        %v1954 = vpop.xlane.xlu0 %1953
        %v1955 = vsel %vm1774, %v1610, 0.0
        %v1956 = vsel %vm1774, %v1612, 0.0
        %v1957 = vadd.f32 %v1955, %v1956
        %1958 = vadd.xlane.f32.xlu0 %v1957
        %v1959 = vpop.xlane.xlu0 %1958
        %v1960 = vadd.f32 %v1614, %v1616
        %1961 = vadd.xlane.f32.xlu0 %v1960
        %v1962 = vpop.xlane.xlu0 %1961
        %v1963 = vadd.f32 %v1618, %v1620
        %1964 = vadd.xlane.f32.xlu0 %v1963
        %v1965 = vpop.xlane.xlu0 %1964
        %v1966 = vadd.f32 %v1622, %v1624
        %1967 = vadd.xlane.f32.xlu0 %v1966
        %v1968 = vpop.xlane.xlu0 %1967
        %v1969 = vadd.f32 %v1626, %v1628
        %1970 = vadd.xlane.f32.xlu0 %v1969
        %v1971 = vpop.xlane.xlu0 %1970
        %v1972 = vadd.f32 %v1630, %v1632
        %1973 = vadd.xlane.f32.xlu0 %v1972
        %v1974 = vpop.xlane.xlu0 %1973
        %v1975 = vsel %vm1774, %v1634, 0.0
        %v1976 = vsel %vm1774, %v1636, 0.0
        %v1977 = vadd.f32 %v1975, %v1976
        %1978 = vadd.xlane.f32.xlu0 %v1977
        %v1979 = vpop.xlane.xlu0 %1978
        %v1980 = vadd.f32 %v1638, %v1640
        %1981 = vadd.xlane.f32.xlu0 %v1980
        %v1982 = vpop.xlane.xlu0 %1981
        %v1983 = vadd.f32 %v1642, %v1644
        %1984 = vadd.xlane.f32.xlu0 %v1983
        %v1985 = vpop.xlane.xlu0 %1984
        %v1986 = vadd.f32 %v1646, %v1648
        %1987 = vadd.xlane.f32.xlu0 %v1986
        %v1988 = vpop.xlane.xlu0 %1987
        %v1989 = vadd.f32 %v1650, %v1652
        %1990 = vadd.xlane.f32.xlu0 %v1989
        %v1991 = vpop.xlane.xlu0 %1990
        %v1992 = vadd.f32 %v1654, %v1656
        %1993 = vadd.xlane.f32.xlu0 %v1992
        %v1994 = vpop.xlane.xlu0 %1993
        %v1995 = vsel %vm1774, %v1658, 0.0
        %v1996 = vsel %vm1774, %v1660, 0.0
        %v1997 = vadd.f32 %v1995, %v1996
        %1998 = vadd.xlane.f32.xlu0 %v1997
        %v1999 = vpop.xlane.xlu0 %1998
        %v2000 = vadd.f32 %v1662, %v1664
        %2001 = vadd.xlane.f32.xlu0 %v2000
        %v2002 = vpop.xlane.xlu0 %2001
        %v2003 = vadd.f32 %v1666, %v1668
        %2004 = vadd.xlane.f32.xlu0 %v2003
        %v2005 = vpop.xlane.xlu0 %2004
        %v2006 = vadd.f32 %v1670, %v1672
        %2007 = vadd.xlane.f32.xlu0 %v2006
        %v2008 = vpop.xlane.xlu0 %2007
        %v2009 = vadd.f32 %v1674, %v1676
        %2010 = vadd.xlane.f32.xlu0 %v2009
        %v2011 = vpop.xlane.xlu0 %2010
        %v2012 = vadd.f32 %v1678, %v1680
        %2013 = vadd.xlane.f32.xlu0 %v2012
        %v2014 = vpop.xlane.xlu0 %2013
        %v2015 = vsel %vm1774, %v1682, 0.0
        %v2016 = vsel %vm1774, %v1684, 0.0
        %v2017 = vadd.f32 %v2015, %v2016
        %2018 = vadd.xlane.f32.xlu0 %v2017
        %v2019 = vpop.xlane.xlu0 %2018
        %v2020 = vadd.f32 %v1686, %v1688
        %2021 = vadd.xlane.f32.xlu0 %v2020
        %v2022 = vpop.xlane.xlu0 %2021
        %v2023 = vadd.f32 %v1690, %v1692
        %2024 = vadd.xlane.f32.xlu0 %v2023
        %v2025 = vpop.xlane.xlu0 %2024
        %v2026 = vadd.f32 %v1694, %v1696
        %2027 = vadd.xlane.f32.xlu0 %v2026
        %v2028 = vpop.xlane.xlu0 %2027
        %v2029 = vadd.f32 %v1698, %v1700
        %2030 = vadd.xlane.f32.xlu0 %v2029
        %v2031 = vpop.xlane.xlu0 %2030
        %v2032 = vadd.f32 %v1702, %v1704
        %2033 = vadd.xlane.f32.xlu0 %v2032
        %v2034 = vpop.xlane.xlu0 %2033
        %v2035 = vsel %vm1774, %v1706, 0.0
        %v2036 = vsel %vm1774, %v1708, 0.0
        %v2037 = vadd.f32 %v2035, %v2036
        %2038 = vadd.xlane.f32.xlu0 %v2037
        %v2039 = vpop.xlane.xlu0 %2038
        %v2040 = vadd.f32 %v1710, %v1712
        %2041 = vadd.xlane.f32.xlu0 %v2040
        %v2042 = vpop.xlane.xlu0 %2041
        %v2043 = vadd.f32 %v1714, %v1716
        %2044 = vadd.xlane.f32.xlu0 %v2043
        %v2045 = vpop.xlane.xlu0 %2044
        %v2046 = vadd.f32 %v1718, %v1720
        %2047 = vadd.xlane.f32.xlu0 %v2046
        %v2048 = vpop.xlane.xlu0 %2047
        %v2049 = vadd.f32 %v1722, %v1724
        %2050 = vadd.xlane.f32.xlu0 %v2049
        %v2051 = vpop.xlane.xlu0 %2050
        %v2052 = vadd.f32 %v1726, %v1728
        %2053 = vadd.xlane.f32.xlu0 %v2052
        %v2054 = vpop.xlane.xlu0 %2053
        %v2055 = vsel %vm1774, %v1730, 0.0
        %v2056 = vsel %vm1774, %v1732, 0.0
        %v2057 = vadd.f32 %v2055, %v2056
        %2058 = vadd.xlane.f32.xlu0 %v2057
        %v2059 = vpop.xlane.xlu0 %2058
        %v2060 = vadd.f32 %v1734, %v1736
        %2061 = vadd.xlane.f32.xlu0 %v2060
        %v2062 = vpop.xlane.xlu0 %2061
        %v2063 = vadd.f32 %v1738, %v1740
        %2064 = vadd.xlane.f32.xlu0 %v2063
        %v2065 = vpop.xlane.xlu0 %2064
        %v2066 = vadd.f32 %v1742, %v1744
        %2067 = vadd.xlane.f32.xlu0 %v2066
        %v2068 = vpop.xlane.xlu0 %2067
        %v2069 = vadd.f32 %v1746, %v1748
        %2070 = vadd.xlane.f32.xlu0 %v2069
        %v2071 = vpop.xlane.xlu0 %2070
        %v2072 = vadd.f32 %v1750, %v1752
        %2073 = vadd.xlane.f32.xlu0 %v2072
        %v2074 = vpop.xlane.xlu0 %2073
        %v2075 = vsel %vm1774, %v1754, 0.0
        %v2076 = vsel %vm1774, %v1756, 0.0
        %v2077 = vadd.f32 %v2075, %v2076
        %2078 = vadd.xlane.f32.xlu0 %v2077
        %v2079 = vpop.xlane.xlu0 %2078
        %v2176 = vlaneseq
        %v2177 = vshrl.u32 %v2176, 7
        %v2178 = vsub.s32 %v494, %v2177
        %v2179 = vrot.slane %v1761, %v2178
        %v2180 = vadd.s32 %v494, 4294967288
        %v2181 = vlaneseq
        %v2182 = vshrl.u32 %v2181, 7
        %v2183 = vsub.s32 %v2180, %v2182
        %v2184 = vrot.slane %v1764, %v2183
        %vm2185 = vcmask 130112
        %v2186 = vsel %vm2185, %v2184, %v2179
        %v2187 = vadd.s32 %v494, 4294967280
        %v2188 = vlaneseq
        %v2189 = vshrl.u32 %v2188, 7
        %v2190 = vsub.s32 %v2187, %v2189
        %v2191 = vrot.slane %v1767, %v2190
        %vm2192 = vcmask 195712
        %v2193 = vsel %vm2192, %v2191, %v2186
        %v2194 = vadd.s32 %v494, 4294967272
        %v2195 = vlaneseq
        %v2196 = vshrl.u32 %v2195, 7
        %v2197 = vsub.s32 %v2194, %v2196
        %v2198 = vrot.slane %v1770, %v2197
        %vm2199 = vcmask 261312
        %v2200 = vsel %vm2199, %v2198, %v2193
        %v2201 = vadd.s32 %v494, 4294967264
        %v2202 = vlaneseq
        %v2203 = vshrl.u32 %v2202, 7
        %v2204 = vsub.s32 %v2201, %v2203
        %v2205 = vrot.slane %v1773, %v2204
        %vm2206 = vcmask 326912
        %v2207 = vsel %vm2206, %v2205, %v2200
        %v2208 = vadd.s32 %v494, 4294967256
        %v2209 = vlaneseq
        %v2210 = vshrl.u32 %v2209, 7
        %v2211 = vsub.s32 %v2208, %v2210
        %v2212 = vrot.slane %v1779, %v2211
        %vm2213 = vcmask 392512
        %v2214 = vsel %vm2213, %v2212, %v2207
        %v2215 = vlaneseq
        %v2216 = vshrl.u32 %v2215, 7
        %v2217 = vsub.s32 %v494, %v2216
        %v2218 = vrot.slane %v1782, %v2217
        %v2219 = vlaneseq
        %v2220 = vshrl.u32 %v2219, 7
        %v2221 = vsub.s32 %v2180, %v2220
        %v2222 = vrot.slane %v1785, %v2221
        %v2223 = vsel %vm2185, %v2222, %v2218
        %v2224 = vlaneseq
        %v2225 = vshrl.u32 %v2224, 7
        %v2226 = vsub.s32 %v2187, %v2225
        %v2227 = vrot.slane %v1788, %v2226
        %v2228 = vsel %vm2192, %v2227, %v2223
        %v2229 = vlaneseq
        %v2230 = vshrl.u32 %v2229, 7
        %v2231 = vsub.s32 %v2194, %v2230
        %v2232 = vrot.slane %v1791, %v2231
        %v2233 = vsel %vm2199, %v2232, %v2228
        %v2234 = vlaneseq
        %v2235 = vshrl.u32 %v2234, 7
        %v2236 = vsub.s32 %v2201, %v2235
        %v2237 = vrot.slane %v1794, %v2236
        %v2238 = vsel %vm2206, %v2237, %v2233
        %v2239 = vlaneseq
        %v2240 = vshrl.u32 %v2239, 7
        %v2241 = vsub.s32 %v2208, %v2240
        %v2242 = vrot.slane %v1799, %v2241
        %v2243 = vsel %vm2213, %v2242, %v2238
        %v2244 = vlaneseq
        %v2245 = vshrl.u32 %v2244, 7
        %v2246 = vsub.s32 %v494, %v2245
        %v2247 = vrot.slane %v1802, %v2246
        %v2248 = vlaneseq
        %v2249 = vshrl.u32 %v2248, 7
        %v2250 = vsub.s32 %v2180, %v2249
        %v2251 = vrot.slane %v1805, %v2250
        %v2252 = vsel %vm2185, %v2251, %v2247
        %v2253 = vlaneseq
        %v2254 = vshrl.u32 %v2253, 7
        %v2255 = vsub.s32 %v2187, %v2254
        %v2256 = vrot.slane %v1808, %v2255
        %v2257 = vsel %vm2192, %v2256, %v2252
        %v2258 = vlaneseq
        %v2259 = vshrl.u32 %v2258, 7
        %v2260 = vsub.s32 %v2194, %v2259
        %v2261 = vrot.slane %v1811, %v2260
        %v2262 = vsel %vm2199, %v2261, %v2257
        %v2263 = vlaneseq
        %v2264 = vshrl.u32 %v2263, 7
        %v2265 = vsub.s32 %v2201, %v2264
        %v2266 = vrot.slane %v1814, %v2265
        %v2267 = vsel %vm2206, %v2266, %v2262
        %v2268 = vlaneseq
        %v2269 = vshrl.u32 %v2268, 7
        %v2270 = vsub.s32 %v2208, %v2269
        %v2271 = vrot.slane %v1819, %v2270
        %v2272 = vsel %vm2213, %v2271, %v2267
        %v2273 = vlaneseq
        %v2274 = vshrl.u32 %v2273, 7
        %v2275 = vsub.s32 %v494, %v2274
        %v2276 = vrot.slane %v1822, %v2275
        %v2277 = vlaneseq
        %v2278 = vshrl.u32 %v2277, 7
        %v2279 = vsub.s32 %v2180, %v2278
        %v2280 = vrot.slane %v1825, %v2279
        %v2281 = vsel %vm2185, %v2280, %v2276
        %v2282 = vlaneseq
        %v2283 = vshrl.u32 %v2282, 7
        %v2284 = vsub.s32 %v2187, %v2283
        %v2285 = vrot.slane %v1828, %v2284
        %v2286 = vsel %vm2192, %v2285, %v2281
        %v2287 = vlaneseq
        %v2288 = vshrl.u32 %v2287, 7
        %v2289 = vsub.s32 %v2194, %v2288
        %v2290 = vrot.slane %v1831, %v2289
        %v2291 = vsel %vm2199, %v2290, %v2286
        %v2292 = vlaneseq
        %v2293 = vshrl.u32 %v2292, 7
        %v2294 = vsub.s32 %v2201, %v2293
        %v2295 = vrot.slane %v1834, %v2294
        %v2296 = vsel %vm2206, %v2295, %v2291
        %v2297 = vlaneseq
        %v2298 = vshrl.u32 %v2297, 7
        %v2299 = vsub.s32 %v2208, %v2298
        %v2300 = vrot.slane %v1839, %v2299
        %v2301 = vsel %vm2213, %v2300, %v2296
        %v2302 = vlaneseq
        %v2303 = vshrl.u32 %v2302, 7
        %v2304 = vsub.s32 %v494, %v2303
        %v2305 = vrot.slane %v1842, %v2304
        %v2306 = vlaneseq
        %v2307 = vshrl.u32 %v2306, 7
        %v2308 = vsub.s32 %v2180, %v2307
        %v2309 = vrot.slane %v1845, %v2308
        %v2310 = vsel %vm2185, %v2309, %v2305
        %v2311 = vlaneseq
        %v2312 = vshrl.u32 %v2311, 7
        %v2313 = vsub.s32 %v2187, %v2312
        %v2314 = vrot.slane %v1848, %v2313
        %v2315 = vsel %vm2192, %v2314, %v2310
        %v2316 = vlaneseq
        %v2317 = vshrl.u32 %v2316, 7
        %v2318 = vsub.s32 %v2194, %v2317
        %v2319 = vrot.slane %v1851, %v2318
        %v2320 = vsel %vm2199, %v2319, %v2315
        %v2321 = vlaneseq
        %v2322 = vshrl.u32 %v2321, 7
        %v2323 = vsub.s32 %v2201, %v2322
        %v2324 = vrot.slane %v1854, %v2323
        %v2325 = vsel %vm2206, %v2324, %v2320
        %v2326 = vlaneseq
        %v2327 = vshrl.u32 %v2326, 7
        %v2328 = vsub.s32 %v2208, %v2327
        %v2329 = vrot.slane %v1859, %v2328
        %v2330 = vsel %vm2213, %v2329, %v2325
        %v2331 = vlaneseq
        %v2332 = vshrl.u32 %v2331, 7
        %v2333 = vsub.s32 %v494, %v2332
        %v2334 = vrot.slane %v1862, %v2333
        %v2335 = vlaneseq
        %v2336 = vshrl.u32 %v2335, 7
        %v2337 = vsub.s32 %v2180, %v2336
        %v2338 = vrot.slane %v1865, %v2337
        %v2339 = vsel %vm2185, %v2338, %v2334
        %v2340 = vlaneseq
        %v2341 = vshrl.u32 %v2340, 7
        %v2342 = vsub.s32 %v2187, %v2341
        %v2343 = vrot.slane %v1868, %v2342
        %v2344 = vsel %vm2192, %v2343, %v2339
        %v2345 = vlaneseq
        %v2346 = vshrl.u32 %v2345, 7
        %v2347 = vsub.s32 %v2194, %v2346
        %v2348 = vrot.slane %v1871, %v2347
        %v2349 = vsel %vm2199, %v2348, %v2344
        %v2350 = vlaneseq
        %v2351 = vshrl.u32 %v2350, 7
        %v2352 = vsub.s32 %v2201, %v2351
        %v2353 = vrot.slane %v1874, %v2352
        %v2354 = vsel %vm2206, %v2353, %v2349
        %v2355 = vlaneseq
        %v2356 = vshrl.u32 %v2355, 7
        %v2357 = vsub.s32 %v2208, %v2356
        %v2358 = vrot.slane %v1879, %v2357
        %v2359 = vsel %vm2213, %v2358, %v2354
        %v2360 = vlaneseq
        %v2361 = vshrl.u32 %v2360, 7
        %v2362 = vsub.s32 %v494, %v2361
        %v2363 = vrot.slane %v1882, %v2362
        %v2364 = vlaneseq
        %v2365 = vshrl.u32 %v2364, 7
        %v2366 = vsub.s32 %v2180, %v2365
        %v2367 = vrot.slane %v1885, %v2366
        %v2368 = vsel %vm2185, %v2367, %v2363
        %v2369 = vlaneseq
        %v2370 = vshrl.u32 %v2369, 7
        %v2371 = vsub.s32 %v2187, %v2370
        %v2372 = vrot.slane %v1888, %v2371
        %v2373 = vsel %vm2192, %v2372, %v2368
        %v2374 = vlaneseq
        %v2375 = vshrl.u32 %v2374, 7
        %v2376 = vsub.s32 %v2194, %v2375
        %v2377 = vrot.slane %v1891, %v2376
        %v2378 = vsel %vm2199, %v2377, %v2373
        %v2379 = vlaneseq
        %v2380 = vshrl.u32 %v2379, 7
        %v2381 = vsub.s32 %v2201, %v2380
        %v2382 = vrot.slane %v1894, %v2381
        %v2383 = vsel %vm2206, %v2382, %v2378
        %v2384 = vlaneseq
        %v2385 = vshrl.u32 %v2384, 7
        %v2386 = vsub.s32 %v2208, %v2385
        %v2387 = vrot.slane %v1899, %v2386
        %v2388 = vsel %vm2213, %v2387, %v2383
        %v2389 = vlaneseq
        %v2390 = vshrl.u32 %v2389, 7
        %v2391 = vsub.s32 %v494, %v2390
        %v2392 = vrot.slane %v1902, %v2391
        %v2393 = vlaneseq
        %v2394 = vshrl.u32 %v2393, 7
        %v2395 = vsub.s32 %v2180, %v2394
        %v2396 = vrot.slane %v1905, %v2395
        %v2397 = vsel %vm2185, %v2396, %v2392
        %v2398 = vlaneseq
        %v2399 = vshrl.u32 %v2398, 7
        %v2400 = vsub.s32 %v2187, %v2399
        %v2401 = vrot.slane %v1908, %v2400
        %v2402 = vsel %vm2192, %v2401, %v2397
        %v2403 = vlaneseq
        %v2404 = vshrl.u32 %v2403, 7
        %v2405 = vsub.s32 %v2194, %v2404
        %v2406 = vrot.slane %v1911, %v2405
        %v2407 = vsel %vm2199, %v2406, %v2402
        %v2408 = vlaneseq
        %v2409 = vshrl.u32 %v2408, 7
        %v2410 = vsub.s32 %v2201, %v2409
        %v2411 = vrot.slane %v1914, %v2410
        %v2412 = vsel %vm2206, %v2411, %v2407
        %v2413 = vlaneseq
        %v2414 = vshrl.u32 %v2413, 7
        %v2415 = vsub.s32 %v2208, %v2414
        %v2416 = vrot.slane %v1919, %v2415
        %v2417 = vsel %vm2213, %v2416, %v2412
        %v2418 = vlaneseq
        %v2419 = vshrl.u32 %v2418, 7
        %v2420 = vsub.s32 %v494, %v2419
        %v2421 = vrot.slane %v1922, %v2420
        %v2422 = vlaneseq
        %v2423 = vshrl.u32 %v2422, 7
        %v2424 = vsub.s32 %v2180, %v2423
        %v2425 = vrot.slane %v1925, %v2424
        %v2426 = vsel %vm2185, %v2425, %v2421
        %v2427 = vlaneseq
        %v2428 = vshrl.u32 %v2427, 7
        %v2429 = vsub.s32 %v2187, %v2428
        %v2430 = vrot.slane %v1928, %v2429
        %v2431 = vsel %vm2192, %v2430, %v2426
        %v2432 = vlaneseq
        %v2433 = vshrl.u32 %v2432, 7
        %v2434 = vsub.s32 %v2194, %v2433
        %v2435 = vrot.slane %v1931, %v2434
        %v2436 = vsel %vm2199, %v2435, %v2431
        %v2437 = vlaneseq
        %v2438 = vshrl.u32 %v2437, 7
        %v2439 = vsub.s32 %v2201, %v2438
        %v2440 = vrot.slane %v1934, %v2439
        %v2441 = vsel %vm2206, %v2440, %v2436
        %v2442 = vlaneseq
        %v2443 = vshrl.u32 %v2442, 7
        %v2444 = vsub.s32 %v2208, %v2443
        %v2445 = vrot.slane %v1939, %v2444
        %v2446 = vsel %vm2213, %v2445, %v2441
        %v2447 = vlaneseq
        %v2448 = vshrl.u32 %v2447, 7
        %v2449 = vsub.s32 %v494, %v2448
        %v2450 = vrot.slane %v1942, %v2449
        %v2451 = vlaneseq
        %v2452 = vshrl.u32 %v2451, 7
        %v2453 = vsub.s32 %v2180, %v2452
        %v2454 = vrot.slane %v1945, %v2453
        %v2455 = vsel %vm2185, %v2454, %v2450
        %v2456 = vlaneseq
        %v2457 = vshrl.u32 %v2456, 7
        %v2458 = vsub.s32 %v2187, %v2457
        %v2459 = vrot.slane %v1948, %v2458
        %v2460 = vsel %vm2192, %v2459, %v2455
        %v2461 = vlaneseq
        %v2462 = vshrl.u32 %v2461, 7
        %v2463 = vsub.s32 %v2194, %v2462
        %v2464 = vrot.slane %v1951, %v2463
        %v2465 = vsel %vm2199, %v2464, %v2460
        %v2466 = vlaneseq
        %v2467 = vshrl.u32 %v2466, 7
        %v2468 = vsub.s32 %v2201, %v2467
        %v2469 = vrot.slane %v1954, %v2468
        %v2470 = vsel %vm2206, %v2469, %v2465
        %v2471 = vlaneseq
        %v2472 = vshrl.u32 %v2471, 7
        %v2473 = vsub.s32 %v2208, %v2472
        %v2474 = vrot.slane %v1959, %v2473
        %v2475 = vsel %vm2213, %v2474, %v2470
        %v2476 = vlaneseq
        %v2477 = vshrl.u32 %v2476, 7
        %v2478 = vsub.s32 %v494, %v2477
        %v2479 = vrot.slane %v1962, %v2478
        %v2480 = vlaneseq
        %v2481 = vshrl.u32 %v2480, 7
        %v2482 = vsub.s32 %v2180, %v2481
        %v2483 = vrot.slane %v1965, %v2482
        %v2484 = vsel %vm2185, %v2483, %v2479
        %v2485 = vlaneseq
        %v2486 = vshrl.u32 %v2485, 7
        %v2487 = vsub.s32 %v2187, %v2486
        %v2488 = vrot.slane %v1968, %v2487
        %v2489 = vsel %vm2192, %v2488, %v2484
        %v2490 = vlaneseq
        %v2491 = vshrl.u32 %v2490, 7
        %v2492 = vsub.s32 %v2194, %v2491
        %v2493 = vrot.slane %v1971, %v2492
        %v2494 = vsel %vm2199, %v2493, %v2489
        %v2495 = vlaneseq
        %v2496 = vshrl.u32 %v2495, 7
        %v2497 = vsub.s32 %v2201, %v2496
        %v2498 = vrot.slane %v1974, %v2497
        %v2499 = vsel %vm2206, %v2498, %v2494
        %v2500 = vlaneseq
        %v2501 = vshrl.u32 %v2500, 7
        %v2502 = vsub.s32 %v2208, %v2501
        %v2503 = vrot.slane %v1979, %v2502
        %v2504 = vsel %vm2213, %v2503, %v2499
        %v2505 = vlaneseq
        %v2506 = vshrl.u32 %v2505, 7
        %v2507 = vsub.s32 %v494, %v2506
        %v2508 = vrot.slane %v1982, %v2507
        %v2509 = vlaneseq
        %v2510 = vshrl.u32 %v2509, 7
        %v2511 = vsub.s32 %v2180, %v2510
        %v2512 = vrot.slane %v1985, %v2511
        %v2513 = vsel %vm2185, %v2512, %v2508
        %v2514 = vlaneseq
        %v2515 = vshrl.u32 %v2514, 7
        %v2516 = vsub.s32 %v2187, %v2515
        %v2517 = vrot.slane %v1988, %v2516
        %v2518 = vsel %vm2192, %v2517, %v2513
        %v2519 = vlaneseq
        %v2520 = vshrl.u32 %v2519, 7
        %v2521 = vsub.s32 %v2194, %v2520
        %v2522 = vrot.slane %v1991, %v2521
        %v2523 = vsel %vm2199, %v2522, %v2518
        %v2524 = vlaneseq
        %v2525 = vshrl.u32 %v2524, 7
        %v2526 = vsub.s32 %v2201, %v2525
        %v2527 = vrot.slane %v1994, %v2526
        %v2528 = vsel %vm2206, %v2527, %v2523
        %v2529 = vlaneseq
        %v2530 = vshrl.u32 %v2529, 7
        %v2531 = vsub.s32 %v2208, %v2530
        %v2532 = vrot.slane %v1999, %v2531
        %v2533 = vsel %vm2213, %v2532, %v2528
        %v2534 = vlaneseq
        %v2535 = vshrl.u32 %v2534, 7
        %v2536 = vsub.s32 %v494, %v2535
        %v2537 = vrot.slane %v2002, %v2536
        %v2538 = vlaneseq
        %v2539 = vshrl.u32 %v2538, 7
        %v2540 = vsub.s32 %v2180, %v2539
        %v2541 = vrot.slane %v2005, %v2540
        %v2542 = vsel %vm2185, %v2541, %v2537
        %v2543 = vlaneseq
        %v2544 = vshrl.u32 %v2543, 7
        %v2545 = vsub.s32 %v2187, %v2544
        %v2546 = vrot.slane %v2008, %v2545
        %v2547 = vsel %vm2192, %v2546, %v2542
        %v2548 = vlaneseq
        %v2549 = vshrl.u32 %v2548, 7
        %v2550 = vsub.s32 %v2194, %v2549
        %v2551 = vrot.slane %v2011, %v2550
        %v2552 = vsel %vm2199, %v2551, %v2547
        %v2553 = vlaneseq
        %v2554 = vshrl.u32 %v2553, 7
        %v2555 = vsub.s32 %v2201, %v2554
        %v2556 = vrot.slane %v2014, %v2555
        %v2557 = vsel %vm2206, %v2556, %v2552
        %v2558 = vlaneseq
        %v2559 = vshrl.u32 %v2558, 7
        %v2560 = vsub.s32 %v2208, %v2559
        %v2561 = vrot.slane %v2019, %v2560
        %v2562 = vsel %vm2213, %v2561, %v2557
        %v2563 = vlaneseq
        %v2564 = vshrl.u32 %v2563, 7
        %v2565 = vsub.s32 %v494, %v2564
        %v2566 = vrot.slane %v2022, %v2565
        %v2567 = vlaneseq
        %v2568 = vshrl.u32 %v2567, 7
        %v2569 = vsub.s32 %v2180, %v2568
        %v2570 = vrot.slane %v2025, %v2569
        %v2571 = vsel %vm2185, %v2570, %v2566
        %v2572 = vlaneseq
        %v2573 = vshrl.u32 %v2572, 7
        %v2574 = vsub.s32 %v2187, %v2573
        %v2575 = vrot.slane %v2028, %v2574
        %v2576 = vsel %vm2192, %v2575, %v2571
        %v2577 = vlaneseq
        %v2578 = vshrl.u32 %v2577, 7
        %v2579 = vsub.s32 %v2194, %v2578
        %v2580 = vrot.slane %v2031, %v2579
        %v2581 = vsel %vm2199, %v2580, %v2576
        %v2582 = vlaneseq
        %v2583 = vshrl.u32 %v2582, 7
        %v2584 = vsub.s32 %v2201, %v2583
        %v2585 = vrot.slane %v2034, %v2584
        %v2586 = vsel %vm2206, %v2585, %v2581
        %v2587 = vlaneseq
        %v2588 = vshrl.u32 %v2587, 7
        %v2589 = vsub.s32 %v2208, %v2588
        %v2590 = vrot.slane %v2039, %v2589
        %v2591 = vsel %vm2213, %v2590, %v2586
        %v2592 = vlaneseq
        %v2593 = vshrl.u32 %v2592, 7
        %v2594 = vsub.s32 %v494, %v2593
        %v2595 = vrot.slane %v2042, %v2594
        %v2596 = vlaneseq
        %v2597 = vshrl.u32 %v2596, 7
        %v2598 = vsub.s32 %v2180, %v2597
        %v2599 = vrot.slane %v2045, %v2598
        %v2600 = vsel %vm2185, %v2599, %v2595
        %v2601 = vlaneseq
        %v2602 = vshrl.u32 %v2601, 7
        %v2603 = vsub.s32 %v2187, %v2602
        %v2604 = vrot.slane %v2048, %v2603
        %v2605 = vsel %vm2192, %v2604, %v2600
        %v2606 = vlaneseq
        %v2607 = vshrl.u32 %v2606, 7
        %v2608 = vsub.s32 %v2194, %v2607
        %v2609 = vrot.slane %v2051, %v2608
        %v2610 = vsel %vm2199, %v2609, %v2605
        %v2611 = vlaneseq
        %v2612 = vshrl.u32 %v2611, 7
        %v2613 = vsub.s32 %v2201, %v2612
        %v2614 = vrot.slane %v2054, %v2613
        %v2615 = vsel %vm2206, %v2614, %v2610
        %v2616 = vlaneseq
        %v2617 = vshrl.u32 %v2616, 7
        %v2618 = vsub.s32 %v2208, %v2617
        %v2619 = vrot.slane %v2059, %v2618
        %v2620 = vsel %vm2213, %v2619, %v2615
        %v2621 = vlaneseq
        %v2622 = vshrl.u32 %v2621, 7
        %v2623 = vsub.s32 %v494, %v2622
        %v2624 = vrot.slane %v2062, %v2623
        %v2625 = vlaneseq
        %v2626 = vshrl.u32 %v2625, 7
        %v2627 = vsub.s32 %v2180, %v2626
        %v2628 = vrot.slane %v2065, %v2627
        %v2629 = vsel %vm2185, %v2628, %v2624
        %v2630 = vlaneseq
        %v2631 = vshrl.u32 %v2630, 7
        %v2632 = vsub.s32 %v2187, %v2631
        %v2633 = vrot.slane %v2068, %v2632
        %v2634 = vsel %vm2192, %v2633, %v2629
        %v2635 = vlaneseq
        %v2636 = vshrl.u32 %v2635, 7
        %v2637 = vsub.s32 %v2194, %v2636
        %v2638 = vrot.slane %v2071, %v2637
        %v2639 = vsel %vm2199, %v2638, %v2634
        %v2640 = vlaneseq
        %v2641 = vshrl.u32 %v2640, 7
        %v2642 = vsub.s32 %v2201, %v2641
        %v2643 = vrot.slane %v2074, %v2642
        %v2644 = vsel %vm2206, %v2643, %v2639
        %v2645 = vlaneseq
        %v2646 = vshrl.u32 %v2645, 7
        %v2647 = vsub.s32 %v2208, %v2646
        %v2648 = vrot.slane %v2079, %v2647
        %v2649 = vsel %vm2213, %v2648, %v2644
        %vm2650 = vcmask 1041409
        %v2651 = vsel %vm2650, %v2243, %v2214
        %vm2652 = vcmask 1042434
        %v2653 = vsel %vm2652, %v2272, %v2651
        %vm2654 = vcmask 1043459
        %v2655 = vsel %vm2654, %v2301, %v2653
        %vm2656 = vcmask 1044484
        %v2657 = vsel %vm2656, %v2330, %v2655
        %vm2658 = vcmask 1045509
        %v2659 = vsel %vm2658, %v2359, %v2657
        %vm2660 = vcmask 1046534
        %v2661 = vsel %vm2660, %v2388, %v2659
        %vm2662 = vcmask 1047559
        %v2663 = vsel %vm2662, %v2417, %v2661
        %v2664 = vsel %vm2650, %v2475, %v2446
        %v2665 = vsel %vm2652, %v2504, %v2664
        %v2666 = vsel %vm2654, %v2533, %v2665
        %v2667 = vsel %vm2656, %v2562, %v2666
        %v2668 = vsel %vm2658, %v2591, %v2667
        %v2669 = vsel %vm2660, %v2620, %v2668
        %v2670 = vsel %vm2662, %v2649, %v2669
        %v2673 = vadd.f32 %v1757, %v2663
        %v2674 = vadd.f32 %v1758, %v2670
        %vm2675 = vcmask 334848
        %2676 = vst.msk [vmem:[#allocation2] sm:$0xff] %vm2675, %v2673
        %2677 = vst.msk [vmem:[#allocation2 + $0x8] sm:$0xff] %vm2675, %v2674
        %p2678 = scmp.eq.s32.totalorder %s23, 1
        // Predicated region
        $region41: #{tpu_custom_call.1} parent=35 // pred_check
          %p2679 = pneg %p2678
        $region42: #{tpu_custom_call.1} parent=35 // pred_check_branch
          %2681 = sbr.rel (%p2679) target = $region44
        $region43: #{tpu_custom_call.1} parent=35 // pred_region
          %v2682 = vld [vmem:[#allocation2] sm:$0xff]
          %v2683 = vld [vmem:[#allocation2 + $0x8] sm:$0xff]
          %v2684 = vmax.f32 %v2682, 1e-10
          %v2685 = vmax.f32 %v2683, 1e-10
          %v2686 = vlog2.pop %v2684
          %v2687 = vmul.f32 %v2686, 0.6931472
          %v2688 = vlog2.pop %v2685
          %v2689 = vmul.f32 %v2688, 0.6931472
          %v2690 = vmul.f32 %v2687, 0.01
          %v2691 = vmul.f32 %v2689, 0.01
          %s2692 = smul.u32 %s22, 16
          %v2693 = vlaneseq
          %v2694 = vshrl.u32 %v2693, 7
          %v2695 = vadd.s32 %v2694, 8
          %v2696 = vstv %s2692
          %v2697 = vadd.s32 %v2696, %v2694
          %v2698 = vadd.s32 %v2696, %v2695
          %vm2699 = vcmp.lt.s32.totalorder %v2697, 24
          %vm2700 = vcmp.lt.s32.totalorder %v2698, 24
          %v2701 = vsel %vm2699, 1, 0
          %v2702 = vsel %vm2700, 1, 0
          %vm2703 = vcmp.eq.s32.totalorder %v2701, 1
          %vm2704 = vcmp.eq.s32.totalorder %v2702, 1
          %v2705 = vsel %vm2703, %v2690, 0.0
          %v2706 = vsel %vm2704, %v2691, 0.0
          %v2707 = vsel %vm2675, %v2705, 0.0
          %v2708 = vsel %vm2675, %v2706, 0.0
          %v2709 = vadd.f32 %v2707, %v2708
          %v2710 = vrot.slane %v2709, 4
          %v2711 = vadd.f32 %v2709, %v2710
          %v2712 = vrot.slane %v2711, 2
          %v2713 = vadd.f32 %v2711, %v2712
          %v2714 = vrot.slane %v2713, 1
          %v2715 = vadd.f32 %v2713, %v2714
          %vm2716 = vcmask 327680
          %2717 = vst.msk [vmem:[%s242] sm:$0x1] %vm2716, %v2715
        $region44: #{tpu_custom_call.1} parent=35 // pred_fallthru
          _
        %s2718 = sand.u32 %s132, 1
        %s2719 = scalar_lea.sflag [#allocation4], %s2718
        %s2720 = sand.u32 %s132, 1
        %s2721 = scalar_lea.vmem [#allocation3], %s2720
        // Predicated region
        $region45: #{tpu_custom_call.1} parent=35 // pred_check
          %p2722 = pneg %p142
        $region46: #{tpu_custom_call.1} parent=35 // pred_check_branch
          %2724 = sbr.rel (%p2722) target = $region48
        $region47: #{tpu_custom_call.1} parent=35 // pred_region
          %s2726 = ssub.s32 16, 16
          %2727 = vsyncadd %s2719, %s2726
          %s2728 = smul.addr %s22, 16
          %s2729 = scalar_lea.hbm %s4, %s2728
          %s2731 = sshll.u32 %s2721, 4
          %s2732 = int_to_ptr.vmem [resolvable:$true] %s2731
          %2734 = dma.vmem_to_hbm [thread:$0]  %s2732, 16, %s2729, %s2719
        $region48: #{tpu_custom_call.1} parent=35 // pred_fallthru
          _
      $region36: #{tpu_custom_call.1} parent=5 // pred_fallthru
        _
      %p2735 = scmp.le.s32.totalorder 2, %s13
      // Predicated region
      $region49: #{tpu_custom_call.1} parent=5 // pred_check
        %p2736 = pneg %p2735
      $region50: #{tpu_custom_call.1} parent=5 // pred_check_branch
        %2738 = sbr.rel (%p2736) target = $region52
      $region51: #{tpu_custom_call.1} parent=5 // pred_region
        %s2739 = ssub.s32 %s13, 2
        // Predicated region
        $region53: #{tpu_custom_call.1} parent=51 // pred_check
          %p2740 = pneg %p148
        $region54: #{tpu_custom_call.1} parent=51 // pred_check_branch
          %2742 = sbr.rel (%p2740) target = $region56
        $region55: #{tpu_custom_call.1} parent=51 // pred_region
          %s2743 = sand.u32 %s133, 1
          %s2744 = scalar_lea.sflag [#allocation4], %s2743
          %s2745 = sand.u32 %s133, 1
          %s2746 = scalar_lea.vmem [#allocation3], %s2745
          %2747 = dma.done %s2744, 16
        $region56: #{tpu_custom_call.1} parent=51 // pred_fallthru
          _
      $region52: #{tpu_custom_call.1} parent=5 // pred_fallthru
        _
    $region6: #{tpu_custom_call.1} parent=1 // loop_footer
      %s17 = sadd.s32 1, %s13
    $region7: #{tpu_custom_call.1} parent=1 // loop_footer_branch
      %12 = sbr.rel target = $region3
    $region8: #{tpu_custom_call.1} parent=1 // loop_exit
      _
    %2748 = vsyncpa [#allocation4], 1
    %s2749 = scalar_lea.sflag [#allocation4], 1
    %2750 = vsyncpa %s2749, 1

</llo_original>
